<compile_context>
chip_gen: v7x
topology: tpu7x:2x2x1
jax: 0.10.0
libtpu: 0.0.40
codegen_flags: <defaults>
</compile_context>

<pallas_src>
import jax
import jax.numpy as jnp
from jax.experimental import pallas as pl
from jax.experimental.pallas import tpu as pltpu

KERNEL = 3  # pooling window size


def _round_up(x, m):
    return -(-x // m) * m


def _maxpool_kernel(x_ref, out_ref, idx_ref):
    # x_ref: (H, W, TB); out_ref/idx_ref: (Ho, Wo, TB).  Planes (TB) on lanes.
    x = x_ref[...]
    H, W, _ = x.shape
    Ho = H - (KERNEL - 1)
    Wo = W - (KERNEL - 1)

    # Initialize from the (0, 0) window element (saves one compare/select pass).
    best_val = x[:Ho, :Wo, :]
    best_off = jnp.zeros(best_val.shape, dtype=jnp.int32)

    # Unrolled scan of the remaining 8 window offsets in row-major order;
    # strict ">" keeps the first maximum (PyTorch tie-breaking).  Only the
    # Python-constant window offset dh*W + dw is tracked per step; the
    # per-position base index is added once at the end.
    for dh in range(KERNEL):
        for dw in range(KERNEL):
            if dh == 0 and dw == 0:
                continue
            cand = x[dh:dh + Ho, dw:dw + Wo, :]
            upd = cand > best_val
            best_val = jnp.where(upd, cand, best_val)
            best_off = jnp.where(upd, jnp.int32(dh * W + dw), best_off)

    rows = jax.lax.broadcasted_iota(jnp.int32, best_off.shape, 0)
    cols = jax.lax.broadcasted_iota(jnp.int32, best_off.shape, 1)
    out_ref[...] = best_val
    idx_ref[...] = rows * W + cols + best_off


def _choose_tb(H, W, Ho, Wo, itemsize, B):
    """Planes (lanes) per grid step; always a multiple of 128 (lane-dense)."""
    # Approximate per-plane VMEM: double-buffered input block, double-buffered
    # (values + indices) output blocks, plus in-kernel temporaries.
    per_lane = (2 * H * W * itemsize
                + 2 * Ho * Wo * (itemsize + 4)
                + 3 * H * W * 4)
    budget = 12 * 1024 * 1024  # stays well inside v7x's 32 MiB scoped VMEM
    tb = max(128, (budget // per_lane) // 128 * 128)
    tb = min(tb, 1024, _round_up(B, 128))
    # Keep >= 2 grid steps when there is enough work so v7x's two TensorCores
    # can both take a share of the "parallel" plane axis.
    if B > 128 and _round_up(B, tb) // tb < 2:
        tb = max(128, _round_up(_round_up(B, 128) // 2, 128))
    return tb


@jax.jit
def maxpool2d_3x3_s1(x):
    """x: (N, C, H, W) float array -> (values, indices), both (N, C, H-2, W-2)."""
    N, C, H, W = x.shape
    Ho, Wo = H - (KERNEL - 1), W - (KERNEL - 1)
    B = N * C

    TB = _choose_tb(H, W, Ho, Wo, x.dtype.itemsize, B)
    BP = _round_up(B, TB)

    # Channel-last: planes on the lane axis, zero-padded to a lane-dense width.
    xt = jnp.transpose(x.reshape(B, H, W), (1, 2, 0))  # (H, W, B)
    if BP != B:
        xt = jnp.pad(xt, ((0, 0), (0, 0), (0, BP - B)))

    vals_t, idx_t = pl.pallas_call(
        _maxpool_kernel,
        out_shape=(
            jax.ShapeDtypeStruct((Ho, Wo, BP), x.dtype),
            jax.ShapeDtypeStruct((Ho, Wo, BP), jnp.int32),
        ),
        grid_spec=pltpu.PrefetchScalarGridSpec(
            num_scalar_prefetch=0,
            grid=(BP // TB,),
            in_specs=[pl.BlockSpec((H, W, TB), lambda b: (0, 0, b))],
            out_specs=(
                pl.BlockSpec((Ho, Wo, TB), lambda b: (0, 0, b)),
                pl.BlockSpec((Ho, Wo, TB), lambda b: (0, 0, b)),
            ),
        ),
        compiler_params=pltpu.CompilerParams(
            dimension_semantics=("parallel",),
            vmem_limit_bytes=32 * 1024 * 1024,
        ),
    )(xt)

    vals = jnp.transpose(vals_t[:, :, :B], (2, 0, 1)).reshape(N, C, Ho, Wo)
    idx = jnp.transpose(idx_t[:, :, :B], (2, 0, 1)).reshape(N, C, Ho, Wo)
    return vals, idx


def _ref_maxpool(x):
    """Pure-JAX reference matching PyTorch MaxPool2d(3, 1, return_indices=True)."""
    N, C, H, W = x.shape
    Ho, Wo = H - (KERNEL - 1), W - (KERNEL - 1)
    wins = jnp.stack(
        [x[:, :, dh:dh + Ho, dw:dw + Wo]
         for dh in range(KERNEL) for dw in range(KERNEL)], axis=0)
    vals = wins.max(axis=0)
    arg = jnp.argmax(wins, axis=0)  # first max, row-major window order
    dh, dw = arg // KERNEL, arg % KERNEL
    rows = jnp.arange(Ho, dtype=jnp.int32)[:, None]
    cols = jnp.arange(Wo, dtype=jnp.int32)[None, :]
    idx = (rows + dh) * W + (cols + dw)
    return vals, idx.astype(jnp.int32)


if __name__ == "__main__":
    key = jax.random.PRNGKey(0)
    x = jax.random.normal(key, (2, 4, 16, 16), dtype=jnp.float32)

    vals, idx = maxpool2d_3x3_s1(x)
    jax.block_until_ready((vals, idx))

    ref_vals, ref_idx = _ref_maxpool(x)
    assert vals.shape == (2, 4, 14, 14) and idx.shape == (2, 4, 14, 14)
    assert jnp.allclose(vals, ref_vals)
    assert jnp.array_equal(idx, ref_idx)

    # Cross-check: gathering at the returned flat indices reproduces the maxima.
    gathered = jnp.take_along_axis(
        x.reshape(2 * 4, -1), idx.reshape(2 * 4, -1), axis=1).reshape(vals.shape)
    assert jnp.allclose(vals, gathered)

    print("KERNEL_OK")
</pallas_src>

<mosaic_0001>
module attributes {stable_mosaic.version = 11 : i64} {
  func.func @_maxpool_kernel(%arg0: i32, %arg1: memref<16x16x128xf32, #tpu.memory_space<vmem>>, %arg2: memref<14x14x128xf32, #tpu.memory_space<vmem>>, %arg3: memref<14x14x128xi32, #tpu.memory_space<vmem>>) attributes {dimension_semantics = [#tpu.dimension_semantics<parallel>], iteration_bounds = array<i64: 1>, scalar_prefetch = 0 : i64, scratch_operands = 0 : i64, tpu.core_type = #tpu.core_type<tc>, window_params = [{transform_indices = @transform_0, window_bounds = array<i64: 16, 16, 128>}, {transform_indices = @transform_1, window_bounds = array<i64: 14, 14, 128>}, {transform_indices = @transform_2, window_bounds = array<i64: 14, 14, 128>}]} {
    %c0 = arith.constant 0 : index
    %c0_0 = arith.constant 0 : index
    %c0_1 = arith.constant 0 : index
    %0 = vector.load %arg1[%c0, %c0_0, %c0_1] : memref<16x16x128xf32, #tpu.memory_space<vmem>>, vector<16x16x128xf32>
    %1 = vector.extract_strided_slice %0 {offsets = [0, 0, 0], sizes = [14, 14, 128], strides = [1, 1, 1]} : vector<16x16x128xf32> to vector<14x14x128xf32>
    %c0_i32 = arith.constant 0 : i32
    %2 = vector.broadcast %c0_i32 : i32 to vector<14x14x128xi32>
    %3 = vector.extract_strided_slice %0 {offsets = [0, 1, 0], sizes = [14, 14, 128], strides = [1, 1, 1]} : vector<16x16x128xf32> to vector<14x14x128xf32>
    %4 = arith.cmpf ogt, %3, %1 : vector<14x14x128xf32>
    %5 = arith.select %4, %3, %1 : vector<14x14x128xi1>, vector<14x14x128xf32>
    %c1_i32 = arith.constant 1 : i32
    %6 = vector.broadcast %c1_i32 : i32 to vector<14x14x128xi32>
    %7 = arith.select %4, %6, %2 : vector<14x14x128xi1>, vector<14x14x128xi32>
    %8 = vector.extract_strided_slice %0 {offsets = [0, 2, 0], sizes = [14, 14, 128], strides = [1, 1, 1]} : vector<16x16x128xf32> to vector<14x14x128xf32>
    %9 = arith.cmpf ogt, %8, %5 : vector<14x14x128xf32>
    %10 = arith.select %9, %8, %5 : vector<14x14x128xi1>, vector<14x14x128xf32>
    %c2_i32 = arith.constant 2 : i32
    %11 = vector.broadcast %c2_i32 : i32 to vector<14x14x128xi32>
    %12 = arith.select %9, %11, %7 : vector<14x14x128xi1>, vector<14x14x128xi32>
    %13 = vector.extract_strided_slice %0 {offsets = [1, 0, 0], sizes = [14, 14, 128], strides = [1, 1, 1]} : vector<16x16x128xf32> to vector<14x14x128xf32>
    %14 = arith.cmpf ogt, %13, %10 : vector<14x14x128xf32>
    %15 = arith.select %14, %13, %10 : vector<14x14x128xi1>, vector<14x14x128xf32>
    %c16_i32 = arith.constant 16 : i32
    %16 = vector.broadcast %c16_i32 : i32 to vector<14x14x128xi32>
    %17 = arith.select %14, %16, %12 : vector<14x14x128xi1>, vector<14x14x128xi32>
    %18 = vector.extract_strided_slice %0 {offsets = [1, 1, 0], sizes = [14, 14, 128], strides = [1, 1, 1]} : vector<16x16x128xf32> to vector<14x14x128xf32>
    %19 = arith.cmpf ogt, %18, %15 : vector<14x14x128xf32>
    %20 = arith.select %19, %18, %15 : vector<14x14x128xi1>, vector<14x14x128xf32>
    %c17_i32 = arith.constant 17 : i32
    %21 = vector.broadcast %c17_i32 : i32 to vector<14x14x128xi32>
    %22 = arith.select %19, %21, %17 : vector<14x14x128xi1>, vector<14x14x128xi32>
    %23 = vector.extract_strided_slice %0 {offsets = [1, 2, 0], sizes = [14, 14, 128], strides = [1, 1, 1]} : vector<16x16x128xf32> to vector<14x14x128xf32>
    %24 = arith.cmpf ogt, %23, %20 : vector<14x14x128xf32>
    %25 = arith.select %24, %23, %20 : vector<14x14x128xi1>, vector<14x14x128xf32>
    %c18_i32 = arith.constant 18 : i32
    %26 = vector.broadcast %c18_i32 : i32 to vector<14x14x128xi32>
    %27 = arith.select %24, %26, %22 : vector<14x14x128xi1>, vector<14x14x128xi32>
    %28 = vector.extract_strided_slice %0 {offsets = [2, 0, 0], sizes = [14, 14, 128], strides = [1, 1, 1]} : vector<16x16x128xf32> to vector<14x14x128xf32>
    %29 = arith.cmpf ogt, %28, %25 : vector<14x14x128xf32>
    %30 = arith.select %29, %28, %25 : vector<14x14x128xi1>, vector<14x14x128xf32>
    %c32_i32 = arith.constant 32 : i32
    %31 = vector.broadcast %c32_i32 : i32 to vector<14x14x128xi32>
    %32 = arith.select %29, %31, %27 : vector<14x14x128xi1>, vector<14x14x128xi32>
    %33 = vector.extract_strided_slice %0 {offsets = [2, 1, 0], sizes = [14, 14, 128], strides = [1, 1, 1]} : vector<16x16x128xf32> to vector<14x14x128xf32>
    %34 = arith.cmpf ogt, %33, %30 : vector<14x14x128xf32>
    %35 = arith.select %34, %33, %30 : vector<14x14x128xi1>, vector<14x14x128xf32>
    %c33_i32 = arith.constant 33 : i32
    %36 = vector.broadcast %c33_i32 : i32 to vector<14x14x128xi32>
    %37 = arith.select %34, %36, %32 : vector<14x14x128xi1>, vector<14x14x128xi32>
    %38 = vector.extract_strided_slice %0 {offsets = [2, 2, 0], sizes = [14, 14, 128], strides = [1, 1, 1]} : vector<16x16x128xf32> to vector<14x14x128xf32>
    %39 = arith.cmpf ogt, %38, %35 : vector<14x14x128xf32>
    %40 = arith.select %39, %38, %35 : vector<14x14x128xi1>, vector<14x14x128xf32>
    %c34_i32 = arith.constant 34 : i32
    %41 = vector.broadcast %c34_i32 : i32 to vector<14x14x128xi32>
    %42 = arith.select %39, %41, %37 : vector<14x14x128xi1>, vector<14x14x128xi32>
    %43 = tpu.iota {dimensions = array<i32: 0>} : vector<14x14x128xi32>
    %44 = tpu.iota {dimensions = array<i32: 1>} : vector<14x14x128xi32>
    %c0_2 = arith.constant 0 : index
    %c0_3 = arith.constant 0 : index
    %c0_4 = arith.constant 0 : index
    %45 = vector.load %arg2[%c0_2, %c0_3, %c0_4] : memref<14x14x128xf32, #tpu.memory_space<vmem>>, vector<14x14x128xf32>
    tpu.vector_store %arg2[%c0_2, %c0_3, %c0_4], %40 {strides = array<i32>} : memref<14x14x128xf32, #tpu.memory_space<vmem>>, vector<14x14x128xf32>,
    %c16_i32_5 = arith.constant 16 : i32
    %46 = vector.broadcast %c16_i32_5 : i32 to vector<14x14x128xi32>
    %47 = arith.muli %43, %46 : vector<14x14x128xi32>
    %48 = arith.addi %47, %44 : vector<14x14x128xi32>
    %49 = arith.addi %48, %42 : vector<14x14x128xi32>
    %c0_6 = arith.constant 0 : index
    %c0_7 = arith.constant 0 : index
    %c0_8 = arith.constant 0 : index
    %50 = vector.load %arg3[%c0_6, %c0_7, %c0_8] : memref<14x14x128xi32, #tpu.memory_space<vmem>>, vector<14x14x128xi32>
    tpu.vector_store %arg3[%c0_6, %c0_7, %c0_8], %49 {strides = array<i32>} : memref<14x14x128xi32, #tpu.memory_space<vmem>>, vector<14x14x128xi32>,
    return
  }
  func.func @transform_0(%arg0: i32) -> (i32, i32, i32) {
    %c0_i32 = arith.constant 0 : i32
    %c0_i32_0 = arith.constant 0 : i32
    %c0_i32_1 = arith.constant 0 : i32
    return %c0_i32, %c0_i32_0, %arg0 : i32, i32, i32
  }
  func.func @transform_1(%arg0: i32) -> (i32, i32, i32) {
    %c0_i32 = arith.constant 0 : i32
    %c0_i32_0 = arith.constant 0 : i32
    %c0_i32_1 = arith.constant 0 : i32
    return %c0_i32, %c0_i32_0, %arg0 : i32, i32, i32
  }
  func.func @transform_2(%arg0: i32) -> (i32, i32, i32) {
    %c0_i32 = arith.constant 0 : i32
    %c0_i32_0 = arith.constant 0 : i32
    %c0_i32_1 = arith.constant 0 : i32
    return %c0_i32, %c0_i32_0, %arg0 : i32, i32, i32
  }
}

</mosaic_0001>

<llo_original>
// kernel: maxpool2d_3x3_s1.1
$region0: #{maxpool2d_3x3_s1.1}
  #allocation0 [shape = 'u32[]', space=smem, size = 0x4, offset = 0x4, fixed_abs, tag = 'smem constant byte address 0x4 - core index']
  #allocation1 [shape = 'u32[144,128]{1,0:T(1,128)}', space=vmem, size = 0x12000, scoped, tag = 'internal scratch']
  %s0 = inlined_call_operand.vmem [shape: f32[16,16,128], index: 0, kind: input, shape index: {}]
  %s1 = inlined_call_operand.vmem [shape: f32[14,14,128], index: 1, kind: output, shape index: {0}]
  %s2 = inlined_call_operand.vmem [shape: s32[14,14,128], index: 2, kind: output, shape index: {1}]
  %3 = xla_tuple %s1, %s2
  %s4 = sld [smem:[#allocation0]]
  $region22: #{maxpool2d_3x3_s1.1} parent=0
    _
  %s6 = ssub.s32 1, %s4
  %s7 = scalar_select 0, %s6, %s4
  // Predicated region
  $region2: #{maxpool2d_3x3_s1.1} parent=0 // pred_check
    _
  $region3: #{maxpool2d_3x3_s1.1} parent=0 // pred_check_branch
    %9 = sbr.rel (0) target = $region5
  $region4: #{maxpool2d_3x3_s1.1} parent=0 // pred_region
    _
  $region5: #{maxpool2d_3x3_s1.1} parent=0 // pred_fallthru
    _
  %v10 = vld [vmem:[%s0] sm:$0xff]
  %v11 = vld [vmem:[%s0 + $0x8] sm:$0xff]
  %v12 = vld [vmem:[%s0 + $0x10] sm:$0xff]
  %v13 = vld [vmem:[%s0 + $0x18] sm:$0xff]
  %v14 = vld [vmem:[%s0 + $0x20] sm:$0xff]
  %v15 = vld [vmem:[%s0 + $0x28] sm:$0xff]
  %v16 = vld [vmem:[%s0 + $0x30] sm:$0xff]
  %v17 = vld [vmem:[%s0 + $0x38] sm:$0xff]
  %v18 = vld [vmem:[%s0 + $0x40] sm:$0xff]
  %v19 = vld [vmem:[%s0 + $0x48] sm:$0xff]
  %v20 = vld [vmem:[%s0 + $0x50] sm:$0xff]
  %v21 = vld [vmem:[%s0 + $0x58] sm:$0xff]
  %v22 = vld [vmem:[%s0 + $0x60] sm:$0xff]
  %v23 = vld [vmem:[%s0 + $0x68] sm:$0xff]
  %v24 = vld [vmem:[%s0 + $0x70] sm:$0xff]
  %v25 = vld [vmem:[%s0 + $0x78] sm:$0xff]
  %v26 = vld [vmem:[%s0 + $0x80] sm:$0xff]
  %v27 = vld [vmem:[%s0 + $0x88] sm:$0xff]
  %v28 = vld [vmem:[%s0 + $0x90] sm:$0xff]
  %v29 = vld [vmem:[%s0 + $0x98] sm:$0xff]
  %v30 = vld [vmem:[%s0 + $0xa0] sm:$0xff]
  %v31 = vld [vmem:[%s0 + $0xa8] sm:$0xff]
  %v32 = vld [vmem:[%s0 + $0xb0] sm:$0xff]
  %v33 = vld [vmem:[%s0 + $0xb8] sm:$0xff]
  %v34 = vld [vmem:[%s0 + $0xc0] sm:$0xff]
  %v35 = vld [vmem:[%s0 + $0xc8] sm:$0xff]
  %v36 = vld [vmem:[%s0 + $0xd0] sm:$0xff]
  %v37 = vld [vmem:[%s0 + $0xd8] sm:$0xff]
  %v38 = vld [vmem:[%s0 + $0xe0] sm:$0xff]
  %v39 = vld [vmem:[%s0 + $0xe8] sm:$0xff]
  %v40 = vld [vmem:[%s0 + $0xf0] sm:$0xff]
  %v41 = vld [vmem:[%s0 + $0xf8] sm:$0xff]
  %vm70 = vcmask 1040384
  %v71 = vrot.slane %v10, 7
  %v72 = vrot.slane %v11, 7
  %v73 = vsel %vm70, %v71, %v72
  %v74 = vrot.slane %v12, 7
  %v75 = vrot.slane %v13, 7
  %v76 = vsel %vm70, %v74, %v75
  %v77 = vrot.slane %v14, 7
  %v78 = vrot.slane %v15, 7
  %v79 = vsel %vm70, %v77, %v78
  %v80 = vrot.slane %v16, 7
  %v81 = vrot.slane %v17, 7
  %v82 = vsel %vm70, %v80, %v81
  %v83 = vrot.slane %v18, 7
  %v84 = vrot.slane %v19, 7
  %v85 = vsel %vm70, %v83, %v84
  %v86 = vrot.slane %v20, 7
  %v87 = vrot.slane %v21, 7
  %v88 = vsel %vm70, %v86, %v87
  %v89 = vrot.slane %v22, 7
  %v90 = vrot.slane %v23, 7
  %v91 = vsel %vm70, %v89, %v90
  %v92 = vrot.slane %v24, 7
  %v93 = vrot.slane %v25, 7
  %v94 = vsel %vm70, %v92, %v93
  %v95 = vrot.slane %v26, 7
  %v96 = vrot.slane %v27, 7
  %v97 = vsel %vm70, %v95, %v96
  %v98 = vrot.slane %v28, 7
  %v99 = vrot.slane %v29, 7
  %v100 = vsel %vm70, %v98, %v99
  %v101 = vrot.slane %v30, 7
  %v102 = vrot.slane %v31, 7
  %v103 = vsel %vm70, %v101, %v102
  %v104 = vrot.slane %v32, 7
  %v105 = vrot.slane %v33, 7
  %v106 = vsel %vm70, %v104, %v105
  %v107 = vrot.slane %v34, 7
  %v108 = vrot.slane %v35, 7
  %v109 = vsel %vm70, %v107, %v108
  %v110 = vrot.slane %v36, 7
  %v111 = vrot.slane %v37, 7
  %v112 = vsel %vm70, %v110, %v111
  %vm141 = vcmp.gt.f32.partialorder %v10, %v71
  %vm142 = vcmp.gt.f32.partialorder %v11, %v73
  %vm143 = vcmp.gt.f32.partialorder %v12, %v74
  %vm144 = vcmp.gt.f32.partialorder %v13, %v76
  %vm145 = vcmp.gt.f32.partialorder %v14, %v77
  %vm146 = vcmp.gt.f32.partialorder %v15, %v79
  %vm147 = vcmp.gt.f32.partialorder %v16, %v80
  %vm148 = vcmp.gt.f32.partialorder %v17, %v82
  %vm149 = vcmp.gt.f32.partialorder %v18, %v83
  %vm150 = vcmp.gt.f32.partialorder %v19, %v85
  %vm151 = vcmp.gt.f32.partialorder %v20, %v86
  %vm152 = vcmp.gt.f32.partialorder %v21, %v88
  %vm153 = vcmp.gt.f32.partialorder %v22, %v89
  %vm154 = vcmp.gt.f32.partialorder %v23, %v91
  %vm155 = vcmp.gt.f32.partialorder %v24, %v92
  %vm156 = vcmp.gt.f32.partialorder %v25, %v94
  %vm157 = vcmp.gt.f32.partialorder %v26, %v95
  %vm158 = vcmp.gt.f32.partialorder %v27, %v97
  %vm159 = vcmp.gt.f32.partialorder %v28, %v98
  %vm160 = vcmp.gt.f32.partialorder %v29, %v100
  %vm161 = vcmp.gt.f32.partialorder %v30, %v101
  %vm162 = vcmp.gt.f32.partialorder %v31, %v103
  %vm163 = vcmp.gt.f32.partialorder %v32, %v104
  %vm164 = vcmp.gt.f32.partialorder %v33, %v106
  %vm165 = vcmp.gt.f32.partialorder %v34, %v107
  %vm166 = vcmp.gt.f32.partialorder %v35, %v109
  %vm167 = vcmp.gt.f32.partialorder %v36, %v110
  %vm168 = vcmp.gt.f32.partialorder %v37, %v112
  %v169 = vsel %vm141, %v10, %v71
  %v170 = vsel %vm142, %v11, %v73
  %v171 = vsel %vm143, %v12, %v74
  %v172 = vsel %vm144, %v13, %v76
  %v173 = vsel %vm145, %v14, %v77
  %v174 = vsel %vm146, %v15, %v79
  %v175 = vsel %vm147, %v16, %v80
  %v176 = vsel %vm148, %v17, %v82
  %v177 = vsel %vm149, %v18, %v83
  %v178 = vsel %vm150, %v19, %v85
  %v179 = vsel %vm151, %v20, %v86
  %v180 = vsel %vm152, %v21, %v88
  %v181 = vsel %vm153, %v22, %v89
  %v182 = vsel %vm154, %v23, %v91
  %v183 = vsel %vm155, %v24, %v92
  %v184 = vsel %vm156, %v25, %v94
  %v185 = vsel %vm157, %v26, %v95
  %v186 = vsel %vm158, %v27, %v97
  %v187 = vsel %vm159, %v28, %v98
  %v188 = vsel %vm160, %v29, %v100
  %v189 = vsel %vm161, %v30, %v101
  %v190 = vsel %vm162, %v31, %v103
  %v191 = vsel %vm163, %v32, %v104
  %v192 = vsel %vm164, %v33, %v106
  %v193 = vsel %vm165, %v34, %v107
  %v194 = vsel %vm166, %v35, %v109
  %v195 = vsel %vm167, %v36, %v110
  %v196 = vsel %vm168, %v37, %v112
  %v197 = vsel %vm141, 1, 0
  %v198 = vsel %vm142, 1, 0
  %v199 = vsel %vm143, 1, 0
  %v200 = vsel %vm144, 1, 0
  %v201 = vsel %vm145, 1, 0
  %v202 = vsel %vm146, 1, 0
  %v203 = vsel %vm147, 1, 0
  %v204 = vsel %vm148, 1, 0
  %v205 = vsel %vm149, 1, 0
  %v206 = vsel %vm150, 1, 0
  %v207 = vsel %vm151, 1, 0
  %v208 = vsel %vm152, 1, 0
  %v209 = vsel %vm153, 1, 0
  %v210 = vsel %vm154, 1, 0
  %v211 = vsel %vm155, 1, 0
  %v212 = vsel %vm156, 1, 0
  %v213 = vsel %vm157, 1, 0
  %v214 = vsel %vm158, 1, 0
  %v215 = vsel %vm159, 1, 0
  %v216 = vsel %vm160, 1, 0
  %v217 = vsel %vm161, 1, 0
  %v218 = vsel %vm162, 1, 0
  %v219 = vsel %vm163, 1, 0
  %v220 = vsel %vm164, 1, 0
  %v221 = vsel %vm165, 1, 0
  %v222 = vsel %vm166, 1, 0
  %v223 = vsel %vm167, 1, 0
  %v224 = vsel %vm168, 1, 0
  %v253 = vrot.slane %v169, 7
  %v254 = vrot.slane %v170, 7
  %v255 = vsel %vm70, %v253, %v254
  %v256 = vrot.slane %v171, 7
  %v257 = vrot.slane %v172, 7
  %v258 = vsel %vm70, %v256, %v257
  %v259 = vrot.slane %v173, 7
  %v260 = vrot.slane %v174, 7
  %v261 = vsel %vm70, %v259, %v260
  %v262 = vrot.slane %v175, 7
  %v263 = vrot.slane %v176, 7
  %v264 = vsel %vm70, %v262, %v263
  %v265 = vrot.slane %v177, 7
  %v266 = vrot.slane %v178, 7
  %v267 = vsel %vm70, %v265, %v266
  %v268 = vrot.slane %v179, 7
  %v269 = vrot.slane %v180, 7
  %v270 = vsel %vm70, %v268, %v269
  %v271 = vrot.slane %v181, 7
  %v272 = vrot.slane %v182, 7
  %v273 = vsel %vm70, %v271, %v272
  %v274 = vrot.slane %v183, 7
  %v275 = vrot.slane %v184, 7
  %v276 = vsel %vm70, %v274, %v275
  %v277 = vrot.slane %v185, 7
  %v278 = vrot.slane %v186, 7
  %v279 = vsel %vm70, %v277, %v278
  %v280 = vrot.slane %v187, 7
  %v281 = vrot.slane %v188, 7
  %v282 = vsel %vm70, %v280, %v281
  %v283 = vrot.slane %v189, 7
  %v284 = vrot.slane %v190, 7
  %v285 = vsel %vm70, %v283, %v284
  %v286 = vrot.slane %v191, 7
  %v287 = vrot.slane %v192, 7
  %v288 = vsel %vm70, %v286, %v287
  %v289 = vrot.slane %v193, 7
  %v290 = vrot.slane %v194, 7
  %v291 = vsel %vm70, %v289, %v290
  %v292 = vrot.slane %v195, 7
  %v293 = vrot.slane %v196, 7
  %v294 = vsel %vm70, %v292, %v293
  %vm323 = vcmp.gt.f32.partialorder %v10, %v253
  %vm324 = vcmp.gt.f32.partialorder %v11, %v255
  %vm325 = vcmp.gt.f32.partialorder %v12, %v256
  %vm326 = vcmp.gt.f32.partialorder %v13, %v258
  %vm327 = vcmp.gt.f32.partialorder %v14, %v259
  %vm328 = vcmp.gt.f32.partialorder %v15, %v261
  %vm329 = vcmp.gt.f32.partialorder %v16, %v262
  %vm330 = vcmp.gt.f32.partialorder %v17, %v264
  %vm331 = vcmp.gt.f32.partialorder %v18, %v265
  %vm332 = vcmp.gt.f32.partialorder %v19, %v267
  %vm333 = vcmp.gt.f32.partialorder %v20, %v268
  %vm334 = vcmp.gt.f32.partialorder %v21, %v270
  %vm335 = vcmp.gt.f32.partialorder %v22, %v271
  %vm336 = vcmp.gt.f32.partialorder %v23, %v273
  %vm337 = vcmp.gt.f32.partialorder %v24, %v274
  %vm338 = vcmp.gt.f32.partialorder %v25, %v276
  %vm339 = vcmp.gt.f32.partialorder %v26, %v277
  %vm340 = vcmp.gt.f32.partialorder %v27, %v279
  %vm341 = vcmp.gt.f32.partialorder %v28, %v280
  %vm342 = vcmp.gt.f32.partialorder %v29, %v282
  %vm343 = vcmp.gt.f32.partialorder %v30, %v283
  %vm344 = vcmp.gt.f32.partialorder %v31, %v285
  %vm345 = vcmp.gt.f32.partialorder %v32, %v286
  %vm346 = vcmp.gt.f32.partialorder %v33, %v288
  %vm347 = vcmp.gt.f32.partialorder %v34, %v289
  %vm348 = vcmp.gt.f32.partialorder %v35, %v291
  %vm349 = vcmp.gt.f32.partialorder %v36, %v292
  %vm350 = vcmp.gt.f32.partialorder %v37, %v294
  %v351 = vsel %vm323, %v10, %v253
  %v352 = vsel %vm324, %v11, %v255
  %v353 = vsel %vm325, %v12, %v256
  %v354 = vsel %vm326, %v13, %v258
  %v355 = vsel %vm327, %v14, %v259
  %v356 = vsel %vm328, %v15, %v261
  %v357 = vsel %vm329, %v16, %v262
  %v358 = vsel %vm330, %v17, %v264
  %v359 = vsel %vm331, %v18, %v265
  %v360 = vsel %vm332, %v19, %v267
  %v361 = vsel %vm333, %v20, %v268
  %v362 = vsel %vm334, %v21, %v270
  %v363 = vsel %vm335, %v22, %v271
  %v364 = vsel %vm336, %v23, %v273
  %v365 = vsel %vm337, %v24, %v274
  %v366 = vsel %vm338, %v25, %v276
  %v367 = vsel %vm339, %v26, %v277
  %v368 = vsel %vm340, %v27, %v279
  %v369 = vsel %vm341, %v28, %v280
  %v370 = vsel %vm342, %v29, %v282
  %v371 = vsel %vm343, %v30, %v283
  %v372 = vsel %vm344, %v31, %v285
  %v373 = vsel %vm345, %v32, %v286
  %v374 = vsel %vm346, %v33, %v288
  %v375 = vsel %vm347, %v34, %v289
  %v376 = vsel %vm348, %v35, %v291
  %v377 = vsel %vm349, %v36, %v292
  %v378 = vsel %vm350, %v37, %v294
  %v379 = vrot.slane %v197, 7
  %v380 = vrot.slane %v198, 7
  %v381 = vsel %vm70, %v379, %v380
  %v382 = vrot.slane %v199, 7
  %v383 = vrot.slane %v200, 7
  %v384 = vsel %vm70, %v382, %v383
  %v385 = vrot.slane %v201, 7
  %v386 = vrot.slane %v202, 7
  %v387 = vsel %vm70, %v385, %v386
  %v388 = vrot.slane %v203, 7
  %v389 = vrot.slane %v204, 7
  %v390 = vsel %vm70, %v388, %v389
  %v391 = vrot.slane %v205, 7
  %v392 = vrot.slane %v206, 7
  %v393 = vsel %vm70, %v391, %v392
  %v394 = vrot.slane %v207, 7
  %v395 = vrot.slane %v208, 7
  %v396 = vsel %vm70, %v394, %v395
  %v397 = vrot.slane %v209, 7
  %v398 = vrot.slane %v210, 7
  %v399 = vsel %vm70, %v397, %v398
  %v400 = vrot.slane %v211, 7
  %v401 = vrot.slane %v212, 7
  %v402 = vsel %vm70, %v400, %v401
  %v403 = vrot.slane %v213, 7
  %v404 = vrot.slane %v214, 7
  %v405 = vsel %vm70, %v403, %v404
  %v406 = vrot.slane %v215, 7
  %v407 = vrot.slane %v216, 7
  %v408 = vsel %vm70, %v406, %v407
  %v409 = vrot.slane %v217, 7
  %v410 = vrot.slane %v218, 7
  %v411 = vsel %vm70, %v409, %v410
  %v412 = vrot.slane %v219, 7
  %v413 = vrot.slane %v220, 7
  %v414 = vsel %vm70, %v412, %v413
  %v415 = vrot.slane %v221, 7
  %v416 = vrot.slane %v222, 7
  %v417 = vsel %vm70, %v415, %v416
  %v418 = vrot.slane %v223, 7
  %v419 = vrot.slane %v224, 7
  %v420 = vsel %vm70, %v418, %v419
  %v421 = vsel %vm323, 2, %v379
  %v422 = vsel %vm324, 2, %v381
  %v423 = vsel %vm325, 2, %v382
  %v424 = vsel %vm326, 2, %v384
  %v425 = vsel %vm327, 2, %v385
  %v426 = vsel %vm328, 2, %v387
  %v427 = vsel %vm329, 2, %v388
  %v428 = vsel %vm330, 2, %v390
  %v429 = vsel %vm331, 2, %v391
  %v430 = vsel %vm332, 2, %v393
  %v431 = vsel %vm333, 2, %v394
  %v432 = vsel %vm334, 2, %v396
  %v433 = vsel %vm335, 2, %v397
  %v434 = vsel %vm336, 2, %v399
  %v435 = vsel %vm337, 2, %v400
  %v436 = vsel %vm338, 2, %v402
  %v437 = vsel %vm339, 2, %v403
  %v438 = vsel %vm340, 2, %v405
  %v439 = vsel %vm341, 2, %v406
  %v440 = vsel %vm342, 2, %v408
  %v441 = vsel %vm343, 2, %v409
  %v442 = vsel %vm344, 2, %v411
  %v443 = vsel %vm345, 2, %v412
  %v444 = vsel %vm346, 2, %v414
  %v445 = vsel %vm347, 2, %v415
  %v446 = vsel %vm348, 2, %v417
  %v447 = vsel %vm349, 2, %v418
  %v448 = vsel %vm350, 2, %v420
  %vm477 = vcmask 1045504
  %v478 = vrot.slane %v351, 2
  %v479 = vrot.slane %v352, 2
  %v480 = vsel %vm477, %v478, %v479
  %v481 = vrot.slane %v353, 2
  %v482 = vrot.slane %v354, 2
  %v483 = vsel %vm477, %v481, %v482
  %v484 = vrot.slane %v355, 2
  %v485 = vrot.slane %v356, 2
  %v486 = vsel %vm477, %v484, %v485
  %v487 = vrot.slane %v357, 2
  %v488 = vrot.slane %v358, 2
  %v489 = vsel %vm477, %v487, %v488
  %v490 = vrot.slane %v359, 2
  %v491 = vrot.slane %v360, 2
  %v492 = vsel %vm477, %v490, %v491
  %v493 = vrot.slane %v361, 2
  %v494 = vrot.slane %v362, 2
  %v495 = vsel %vm477, %v493, %v494
  %v496 = vrot.slane %v363, 2
  %v497 = vrot.slane %v364, 2
  %v498 = vsel %vm477, %v496, %v497
  %v499 = vrot.slane %v365, 2
  %v500 = vrot.slane %v366, 2
  %v501 = vsel %vm477, %v499, %v500
  %v502 = vrot.slane %v367, 2
  %v503 = vrot.slane %v368, 2
  %v504 = vsel %vm477, %v502, %v503
  %v505 = vrot.slane %v369, 2
  %v506 = vrot.slane %v370, 2
  %v507 = vsel %vm477, %v505, %v506
  %v508 = vrot.slane %v371, 2
  %v509 = vrot.slane %v372, 2
  %v510 = vsel %vm477, %v508, %v509
  %v511 = vrot.slane %v373, 2
  %v512 = vrot.slane %v374, 2
  %v513 = vsel %vm477, %v511, %v512
  %v514 = vrot.slane %v375, 2
  %v515 = vrot.slane %v376, 2
  %v516 = vsel %vm477, %v514, %v515
  %v517 = vrot.slane %v377, 2
  %v518 = vrot.slane %v378, 2
  %v519 = vsel %vm477, %v517, %v518
  %vm548 = vcmp.gt.f32.partialorder %v12, %v480
  %vm549 = vcmp.gt.f32.partialorder %v13, %v479
  %vm550 = vcmp.gt.f32.partialorder %v14, %v483
  %vm551 = vcmp.gt.f32.partialorder %v15, %v482
  %vm552 = vcmp.gt.f32.partialorder %v16, %v486
  %vm553 = vcmp.gt.f32.partialorder %v17, %v485
  %vm554 = vcmp.gt.f32.partialorder %v18, %v489
  %vm555 = vcmp.gt.f32.partialorder %v19, %v488
  %vm556 = vcmp.gt.f32.partialorder %v20, %v492
  %vm557 = vcmp.gt.f32.partialorder %v21, %v491
  %vm558 = vcmp.gt.f32.partialorder %v22, %v495
  %vm559 = vcmp.gt.f32.partialorder %v23, %v494
  %vm560 = vcmp.gt.f32.partialorder %v24, %v498
  %vm561 = vcmp.gt.f32.partialorder %v25, %v497
  %vm562 = vcmp.gt.f32.partialorder %v26, %v501
  %vm563 = vcmp.gt.f32.partialorder %v27, %v500
  %vm564 = vcmp.gt.f32.partialorder %v28, %v504
  %vm565 = vcmp.gt.f32.partialorder %v29, %v503
  %vm566 = vcmp.gt.f32.partialorder %v30, %v507
  %vm567 = vcmp.gt.f32.partialorder %v31, %v506
  %vm568 = vcmp.gt.f32.partialorder %v32, %v510
  %vm569 = vcmp.gt.f32.partialorder %v33, %v509
  %vm570 = vcmp.gt.f32.partialorder %v34, %v513
  %vm571 = vcmp.gt.f32.partialorder %v35, %v512
  %vm572 = vcmp.gt.f32.partialorder %v36, %v516
  %vm573 = vcmp.gt.f32.partialorder %v37, %v515
  %vm574 = vcmp.gt.f32.partialorder %v38, %v519
  %vm575 = vcmp.gt.f32.partialorder %v39, %v518
  %v576 = vsel %vm548, %v12, %v480
  %v577 = vsel %vm549, %v13, %v479
  %v578 = vsel %vm550, %v14, %v483
  %v579 = vsel %vm551, %v15, %v482
  %v580 = vsel %vm552, %v16, %v486
  %v581 = vsel %vm553, %v17, %v485
  %v582 = vsel %vm554, %v18, %v489
  %v583 = vsel %vm555, %v19, %v488
  %v584 = vsel %vm556, %v20, %v492
  %v585 = vsel %vm557, %v21, %v491
  %v586 = vsel %vm558, %v22, %v495
  %v587 = vsel %vm559, %v23, %v494
  %v588 = vsel %vm560, %v24, %v498
  %v589 = vsel %vm561, %v25, %v497
  %v590 = vsel %vm562, %v26, %v501
  %v591 = vsel %vm563, %v27, %v500
  %v592 = vsel %vm564, %v28, %v504
  %v593 = vsel %vm565, %v29, %v503
  %v594 = vsel %vm566, %v30, %v507
  %v595 = vsel %vm567, %v31, %v506
  %v596 = vsel %vm568, %v32, %v510
  %v597 = vsel %vm569, %v33, %v509
  %v598 = vsel %vm570, %v34, %v513
  %v599 = vsel %vm571, %v35, %v512
  %v600 = vsel %vm572, %v36, %v516
  %v601 = vsel %vm573, %v37, %v515
  %v602 = vsel %vm574, %v38, %v519
  %v603 = vsel %vm575, %v39, %v518
  %v604 = vrot.slane %v421, 2
  %v605 = vrot.slane %v422, 2
  %v606 = vsel %vm477, %v604, %v605
  %v607 = vrot.slane %v423, 2
  %v608 = vrot.slane %v424, 2
  %v609 = vsel %vm477, %v607, %v608
  %v610 = vrot.slane %v425, 2
  %v611 = vrot.slane %v426, 2
  %v612 = vsel %vm477, %v610, %v611
  %v613 = vrot.slane %v427, 2
  %v614 = vrot.slane %v428, 2
  %v615 = vsel %vm477, %v613, %v614
  %v616 = vrot.slane %v429, 2
  %v617 = vrot.slane %v430, 2
  %v618 = vsel %vm477, %v616, %v617
  %v619 = vrot.slane %v431, 2
  %v620 = vrot.slane %v432, 2
  %v621 = vsel %vm477, %v619, %v620
  %v622 = vrot.slane %v433, 2
  %v623 = vrot.slane %v434, 2
  %v624 = vsel %vm477, %v622, %v623
  %v625 = vrot.slane %v435, 2
  %v626 = vrot.slane %v436, 2
  %v627 = vsel %vm477, %v625, %v626
  %v628 = vrot.slane %v437, 2
  %v629 = vrot.slane %v438, 2
  %v630 = vsel %vm477, %v628, %v629
  %v631 = vrot.slane %v439, 2
  %v632 = vrot.slane %v440, 2
  %v633 = vsel %vm477, %v631, %v632
  %v634 = vrot.slane %v441, 2
  %v635 = vrot.slane %v442, 2
  %v636 = vsel %vm477, %v634, %v635
  %v637 = vrot.slane %v443, 2
  %v638 = vrot.slane %v444, 2
  %v639 = vsel %vm477, %v637, %v638
  %v640 = vrot.slane %v445, 2
  %v641 = vrot.slane %v446, 2
  %v642 = vsel %vm477, %v640, %v641
  %v643 = vrot.slane %v447, 2
  %v644 = vrot.slane %v448, 2
  %v645 = vsel %vm477, %v643, %v644
  %v646 = vsel %vm548, 16, %v606
  %v647 = vsel %vm549, 16, %v605
  %v648 = vsel %vm550, 16, %v609
  %v649 = vsel %vm551, 16, %v608
  %v650 = vsel %vm552, 16, %v612
  %v651 = vsel %vm553, 16, %v611
  %v652 = vsel %vm554, 16, %v615
  %v653 = vsel %vm555, 16, %v614
  %v654 = vsel %vm556, 16, %v618
  %v655 = vsel %vm557, 16, %v617
  %v656 = vsel %vm558, 16, %v621
  %v657 = vsel %vm559, 16, %v620
  %v658 = vsel %vm560, 16, %v624
  %v659 = vsel %vm561, 16, %v623
  %v660 = vsel %vm562, 16, %v627
  %v661 = vsel %vm563, 16, %v626
  %v662 = vsel %vm564, 16, %v630
  %v663 = vsel %vm565, 16, %v629
  %v664 = vsel %vm566, 16, %v633
  %v665 = vsel %vm567, 16, %v632
  %v666 = vsel %vm568, 16, %v636
  %v667 = vsel %vm569, 16, %v635
  %v668 = vsel %vm570, 16, %v639
  %v669 = vsel %vm571, 16, %v638
  %v670 = vsel %vm572, 16, %v642
  %v671 = vsel %vm573, 16, %v641
  %v672 = vsel %vm574, 16, %v645
  %v673 = vsel %vm575, 16, %v644
  %v702 = vrot.slane %v576, 7
  %v703 = vrot.slane %v577, 7
  %v704 = vsel %vm70, %v702, %v703
  %v705 = vrot.slane %v578, 7
  %v706 = vrot.slane %v579, 7
  %v707 = vsel %vm70, %v705, %v706
  %v708 = vrot.slane %v580, 7
  %v709 = vrot.slane %v581, 7
  %v710 = vsel %vm70, %v708, %v709
  %v711 = vrot.slane %v582, 7
  %v712 = vrot.slane %v583, 7
  %v713 = vsel %vm70, %v711, %v712
  %v714 = vrot.slane %v584, 7
  %v715 = vrot.slane %v585, 7
  %v716 = vsel %vm70, %v714, %v715
  %v717 = vrot.slane %v586, 7
  %v718 = vrot.slane %v587, 7
  %v719 = vsel %vm70, %v717, %v718
  %v720 = vrot.slane %v588, 7
  %v721 = vrot.slane %v589, 7
  %v722 = vsel %vm70, %v720, %v721
  %v723 = vrot.slane %v590, 7
  %v724 = vrot.slane %v591, 7
  %v725 = vsel %vm70, %v723, %v724
  %v726 = vrot.slane %v592, 7
  %v727 = vrot.slane %v593, 7
  %v728 = vsel %vm70, %v726, %v727
  %v729 = vrot.slane %v594, 7
  %v730 = vrot.slane %v595, 7
  %v731 = vsel %vm70, %v729, %v730
  %v732 = vrot.slane %v596, 7
  %v733 = vrot.slane %v597, 7
  %v734 = vsel %vm70, %v732, %v733
  %v735 = vrot.slane %v598, 7
  %v736 = vrot.slane %v599, 7
  %v737 = vsel %vm70, %v735, %v736
  %v738 = vrot.slane %v600, 7
  %v739 = vrot.slane %v601, 7
  %v740 = vsel %vm70, %v738, %v739
  %v741 = vrot.slane %v602, 7
  %v742 = vrot.slane %v603, 7
  %v743 = vsel %vm70, %v741, %v742
  %vm772 = vcmp.gt.f32.partialorder %v12, %v702
  %vm773 = vcmp.gt.f32.partialorder %v13, %v704
  %vm774 = vcmp.gt.f32.partialorder %v14, %v705
  %vm775 = vcmp.gt.f32.partialorder %v15, %v707
  %vm776 = vcmp.gt.f32.partialorder %v16, %v708
  %vm777 = vcmp.gt.f32.partialorder %v17, %v710
  %vm778 = vcmp.gt.f32.partialorder %v18, %v711
  %vm779 = vcmp.gt.f32.partialorder %v19, %v713
  %vm780 = vcmp.gt.f32.partialorder %v20, %v714
  %vm781 = vcmp.gt.f32.partialorder %v21, %v716
  %vm782 = vcmp.gt.f32.partialorder %v22, %v717
  %vm783 = vcmp.gt.f32.partialorder %v23, %v719
  %vm784 = vcmp.gt.f32.partialorder %v24, %v720
  %vm785 = vcmp.gt.f32.partialorder %v25, %v722
  %vm786 = vcmp.gt.f32.partialorder %v26, %v723
  %vm787 = vcmp.gt.f32.partialorder %v27, %v725
  %vm788 = vcmp.gt.f32.partialorder %v28, %v726
  %vm789 = vcmp.gt.f32.partialorder %v29, %v728
  %vm790 = vcmp.gt.f32.partialorder %v30, %v729
  %vm791 = vcmp.gt.f32.partialorder %v31, %v731
  %vm792 = vcmp.gt.f32.partialorder %v32, %v732
  %vm793 = vcmp.gt.f32.partialorder %v33, %v734
  %vm794 = vcmp.gt.f32.partialorder %v34, %v735
  %vm795 = vcmp.gt.f32.partialorder %v35, %v737
  %vm796 = vcmp.gt.f32.partialorder %v36, %v738
  %vm797 = vcmp.gt.f32.partialorder %v37, %v740
  %vm798 = vcmp.gt.f32.partialorder %v38, %v741
  %vm799 = vcmp.gt.f32.partialorder %v39, %v743
  %v800 = vsel %vm772, %v12, %v702
  %v801 = vsel %vm773, %v13, %v704
  %v802 = vsel %vm774, %v14, %v705
  %v803 = vsel %vm775, %v15, %v707
  %v804 = vsel %vm776, %v16, %v708
  %v805 = vsel %vm777, %v17, %v710
  %v806 = vsel %vm778, %v18, %v711
  %v807 = vsel %vm779, %v19, %v713
  %v808 = vsel %vm780, %v20, %v714
  %v809 = vsel %vm781, %v21, %v716
  %v810 = vsel %vm782, %v22, %v717
  %v811 = vsel %vm783, %v23, %v719
  %v812 = vsel %vm784, %v24, %v720
  %v813 = vsel %vm785, %v25, %v722
  %v814 = vsel %vm786, %v26, %v723
  %v815 = vsel %vm787, %v27, %v725
  %v816 = vsel %vm788, %v28, %v726
  %v817 = vsel %vm789, %v29, %v728
  %v818 = vsel %vm790, %v30, %v729
  %v819 = vsel %vm791, %v31, %v731
  %v820 = vsel %vm792, %v32, %v732
  %v821 = vsel %vm793, %v33, %v734
  %v822 = vsel %vm794, %v34, %v735
  %v823 = vsel %vm795, %v35, %v737
  %v824 = vsel %vm796, %v36, %v738
  %v825 = vsel %vm797, %v37, %v740
  %v826 = vsel %vm798, %v38, %v741
  %v827 = vsel %vm799, %v39, %v743
  %v828 = vrot.slane %v646, 7
  %v829 = vrot.slane %v647, 7
  %v830 = vsel %vm70, %v828, %v829
  %v831 = vrot.slane %v648, 7
  %v832 = vrot.slane %v649, 7
  %v833 = vsel %vm70, %v831, %v832
  %v834 = vrot.slane %v650, 7
  %v835 = vrot.slane %v651, 7
  %v836 = vsel %vm70, %v834, %v835
  %v837 = vrot.slane %v652, 7
  %v838 = vrot.slane %v653, 7
  %v839 = vsel %vm70, %v837, %v838
  %v840 = vrot.slane %v654, 7
  %v841 = vrot.slane %v655, 7
  %v842 = vsel %vm70, %v840, %v841
  %v843 = vrot.slane %v656, 7
  %v844 = vrot.slane %v657, 7
  %v845 = vsel %vm70, %v843, %v844
  %v846 = vrot.slane %v658, 7
  %v847 = vrot.slane %v659, 7
  %v848 = vsel %vm70, %v846, %v847
  %v849 = vrot.slane %v660, 7
  %v850 = vrot.slane %v661, 7
  %v851 = vsel %vm70, %v849, %v850
  %v852 = vrot.slane %v662, 7
  %v853 = vrot.slane %v663, 7
  %v854 = vsel %vm70, %v852, %v853
  %v855 = vrot.slane %v664, 7
  %v856 = vrot.slane %v665, 7
  %v857 = vsel %vm70, %v855, %v856
  %v858 = vrot.slane %v666, 7
  %v859 = vrot.slane %v667, 7
  %v860 = vsel %vm70, %v858, %v859
  %v861 = vrot.slane %v668, 7
  %v862 = vrot.slane %v669, 7
  %v863 = vsel %vm70, %v861, %v862
  %v864 = vrot.slane %v670, 7
  %v865 = vrot.slane %v671, 7
  %v866 = vsel %vm70, %v864, %v865
  %v867 = vrot.slane %v672, 7
  %v868 = vrot.slane %v673, 7
  %v869 = vsel %vm70, %v867, %v868
  %v870 = vsel %vm772, 17, %v828
  %v871 = vsel %vm773, 17, %v830
  %v872 = vsel %vm774, 17, %v831
  %v873 = vsel %vm775, 17, %v833
  %v874 = vsel %vm776, 17, %v834
  %v875 = vsel %vm777, 17, %v836
  %v876 = vsel %vm778, 17, %v837
  %v877 = vsel %vm779, 17, %v839
  %v878 = vsel %vm780, 17, %v840
  %v879 = vsel %vm781, 17, %v842
  %v880 = vsel %vm782, 17, %v843
  %v881 = vsel %vm783, 17, %v845
  %v882 = vsel %vm784, 17, %v846
  %v883 = vsel %vm785, 17, %v848
  %v884 = vsel %vm786, 17, %v849
  %v885 = vsel %vm787, 17, %v851
  %v886 = vsel %vm788, 17, %v852
  %v887 = vsel %vm789, 17, %v854
  %v888 = vsel %vm790, 17, %v855
  %v889 = vsel %vm791, 17, %v857
  %v890 = vsel %vm792, 17, %v858
  %v891 = vsel %vm793, 17, %v860
  %v892 = vsel %vm794, 17, %v861
  %v893 = vsel %vm795, 17, %v863
  %v894 = vsel %vm796, 17, %v864
  %v895 = vsel %vm797, 17, %v866
  %v896 = vsel %vm798, 17, %v867
  %v897 = vsel %vm799, 17, %v869
  %v926 = vrot.slane %v800, 7
  %v927 = vrot.slane %v801, 7
  %v928 = vsel %vm70, %v926, %v927
  %v929 = vrot.slane %v802, 7
  %v930 = vrot.slane %v803, 7
  %v931 = vsel %vm70, %v929, %v930
  %v932 = vrot.slane %v804, 7
  %v933 = vrot.slane %v805, 7
  %v934 = vsel %vm70, %v932, %v933
  %v935 = vrot.slane %v806, 7
  %v936 = vrot.slane %v807, 7
  %v937 = vsel %vm70, %v935, %v936
  %v938 = vrot.slane %v808, 7
  %v939 = vrot.slane %v809, 7
  %v940 = vsel %vm70, %v938, %v939
  %v941 = vrot.slane %v810, 7
  %v942 = vrot.slane %v811, 7
  %v943 = vsel %vm70, %v941, %v942
  %v944 = vrot.slane %v812, 7
  %v945 = vrot.slane %v813, 7
  %v946 = vsel %vm70, %v944, %v945
  %v947 = vrot.slane %v814, 7
  %v948 = vrot.slane %v815, 7
  %v949 = vsel %vm70, %v947, %v948
  %v950 = vrot.slane %v816, 7
  %v951 = vrot.slane %v817, 7
  %v952 = vsel %vm70, %v950, %v951
  %v953 = vrot.slane %v818, 7
  %v954 = vrot.slane %v819, 7
  %v955 = vsel %vm70, %v953, %v954
  %v956 = vrot.slane %v820, 7
  %v957 = vrot.slane %v821, 7
  %v958 = vsel %vm70, %v956, %v957
  %v959 = vrot.slane %v822, 7
  %v960 = vrot.slane %v823, 7
  %v961 = vsel %vm70, %v959, %v960
  %v962 = vrot.slane %v824, 7
  %v963 = vrot.slane %v825, 7
  %v964 = vsel %vm70, %v962, %v963
  %v965 = vrot.slane %v826, 7
  %v966 = vrot.slane %v827, 7
  %v967 = vsel %vm70, %v965, %v966
  %vm996 = vcmp.gt.f32.partialorder %v12, %v926
  %vm997 = vcmp.gt.f32.partialorder %v13, %v928
  %vm998 = vcmp.gt.f32.partialorder %v14, %v929
  %vm999 = vcmp.gt.f32.partialorder %v15, %v931
  %vm1000 = vcmp.gt.f32.partialorder %v16, %v932
  %vm1001 = vcmp.gt.f32.partialorder %v17, %v934
  %vm1002 = vcmp.gt.f32.partialorder %v18, %v935
  %vm1003 = vcmp.gt.f32.partialorder %v19, %v937
  %vm1004 = vcmp.gt.f32.partialorder %v20, %v938
  %vm1005 = vcmp.gt.f32.partialorder %v21, %v940
  %vm1006 = vcmp.gt.f32.partialorder %v22, %v941
  %vm1007 = vcmp.gt.f32.partialorder %v23, %v943
  %vm1008 = vcmp.gt.f32.partialorder %v24, %v944
  %vm1009 = vcmp.gt.f32.partialorder %v25, %v946
  %vm1010 = vcmp.gt.f32.partialorder %v26, %v947
  %vm1011 = vcmp.gt.f32.partialorder %v27, %v949
  %vm1012 = vcmp.gt.f32.partialorder %v28, %v950
  %vm1013 = vcmp.gt.f32.partialorder %v29, %v952
  %vm1014 = vcmp.gt.f32.partialorder %v30, %v953
  %vm1015 = vcmp.gt.f32.partialorder %v31, %v955
  %vm1016 = vcmp.gt.f32.partialorder %v32, %v956
  %vm1017 = vcmp.gt.f32.partialorder %v33, %v958
  %vm1018 = vcmp.gt.f32.partialorder %v34, %v959
  %vm1019 = vcmp.gt.f32.partialorder %v35, %v961
  %vm1020 = vcmp.gt.f32.partialorder %v36, %v962
  %vm1021 = vcmp.gt.f32.partialorder %v37, %v964
  %vm1022 = vcmp.gt.f32.partialorder %v38, %v965
  %vm1023 = vcmp.gt.f32.partialorder %v39, %v967
  %v1024 = vsel %vm996, %v12, %v926
  %v1025 = vsel %vm997, %v13, %v928
  %v1026 = vsel %vm998, %v14, %v929
  %v1027 = vsel %vm999, %v15, %v931
  %v1028 = vsel %vm1000, %v16, %v932
  %v1029 = vsel %vm1001, %v17, %v934
  %v1030 = vsel %vm1002, %v18, %v935
  %v1031 = vsel %vm1003, %v19, %v937
  %v1032 = vsel %vm1004, %v20, %v938
  %v1033 = vsel %vm1005, %v21, %v940
  %v1034 = vsel %vm1006, %v22, %v941
  %v1035 = vsel %vm1007, %v23, %v943
  %v1036 = vsel %vm1008, %v24, %v944
  %v1037 = vsel %vm1009, %v25, %v946
  %v1038 = vsel %vm1010, %v26, %v947
  %v1039 = vsel %vm1011, %v27, %v949
  %v1040 = vsel %vm1012, %v28, %v950
  %v1041 = vsel %vm1013, %v29, %v952
  %v1042 = vsel %vm1014, %v30, %v953
  %v1043 = vsel %vm1015, %v31, %v955
  %v1044 = vsel %vm1016, %v32, %v956
  %v1045 = vsel %vm1017, %v33, %v958
  %v1046 = vsel %vm1018, %v34, %v959
  %v1047 = vsel %vm1019, %v35, %v961
  %v1048 = vsel %vm1020, %v36, %v962
  %v1049 = vsel %vm1021, %v37, %v964
  %v1050 = vsel %vm1022, %v38, %v965
  %v1051 = vsel %vm1023, %v39, %v967
  %v1052 = vrot.slane %v870, 7
  %v1053 = vrot.slane %v871, 7
  %v1054 = vsel %vm70, %v1052, %v1053
  %v1055 = vrot.slane %v872, 7
  %v1056 = vrot.slane %v873, 7
  %v1057 = vsel %vm70, %v1055, %v1056
  %v1058 = vrot.slane %v874, 7
  %v1059 = vrot.slane %v875, 7
  %v1060 = vsel %vm70, %v1058, %v1059
  %v1061 = vrot.slane %v876, 7
  %v1062 = vrot.slane %v877, 7
  %v1063 = vsel %vm70, %v1061, %v1062
  %v1064 = vrot.slane %v878, 7
  %v1065 = vrot.slane %v879, 7
  %v1066 = vsel %vm70, %v1064, %v1065
  %v1067 = vrot.slane %v880, 7
  %v1068 = vrot.slane %v881, 7
  %v1069 = vsel %vm70, %v1067, %v1068
  %v1070 = vrot.slane %v882, 7
  %v1071 = vrot.slane %v883, 7
  %v1072 = vsel %vm70, %v1070, %v1071
  %v1073 = vrot.slane %v884, 7
  %v1074 = vrot.slane %v885, 7
  %v1075 = vsel %vm70, %v1073, %v1074
  %v1076 = vrot.slane %v886, 7
  %v1077 = vrot.slane %v887, 7
  %v1078 = vsel %vm70, %v1076, %v1077
  %v1079 = vrot.slane %v888, 7
  %v1080 = vrot.slane %v889, 7
  %v1081 = vsel %vm70, %v1079, %v1080
  %v1082 = vrot.slane %v890, 7
  %v1083 = vrot.slane %v891, 7
  %v1084 = vsel %vm70, %v1082, %v1083
  %v1085 = vrot.slane %v892, 7
  %v1086 = vrot.slane %v893, 7
  %v1087 = vsel %vm70, %v1085, %v1086
  %v1088 = vrot.slane %v894, 7
  %v1089 = vrot.slane %v895, 7
  %v1090 = vsel %vm70, %v1088, %v1089
  %v1091 = vrot.slane %v896, 7
  %v1092 = vrot.slane %v897, 7
  %v1093 = vsel %vm70, %v1091, %v1092
  %v1094 = vsel %vm996, 18, %v1052
  %v1095 = vsel %vm997, 18, %v1054
  %v1096 = vsel %vm998, 18, %v1055
  %v1097 = vsel %vm999, 18, %v1057
  %v1098 = vsel %vm1000, 18, %v1058
  %v1099 = vsel %vm1001, 18, %v1060
  %v1100 = vsel %vm1002, 18, %v1061
  %v1101 = vsel %vm1003, 18, %v1063
  %v1102 = vsel %vm1004, 18, %v1064
  %v1103 = vsel %vm1005, 18, %v1066
  %v1104 = vsel %vm1006, 18, %v1067
  %v1105 = vsel %vm1007, 18, %v1069
  %v1106 = vsel %vm1008, 18, %v1070
  %v1107 = vsel %vm1009, 18, %v1072
  %v1108 = vsel %vm1010, 18, %v1073
  %v1109 = vsel %vm1011, 18, %v1075
  %v1110 = vsel %vm1012, 18, %v1076
  %v1111 = vsel %vm1013, 18, %v1078
  %v1112 = vsel %vm1014, 18, %v1079
  %v1113 = vsel %vm1015, 18, %v1081
  %v1114 = vsel %vm1016, 18, %v1082
  %v1115 = vsel %vm1017, 18, %v1084
  %v1116 = vsel %vm1018, 18, %v1085
  %v1117 = vsel %vm1019, 18, %v1087
  %v1118 = vsel %vm1020, 18, %v1088
  %v1119 = vsel %vm1021, 18, %v1090
  %v1120 = vsel %vm1022, 18, %v1091
  %v1121 = vsel %vm1023, 18, %v1093
  %v1150 = vrot.slane %v1024, 2
  %v1151 = vrot.slane %v1025, 2
  %v1152 = vsel %vm477, %v1150, %v1151
  %v1153 = vrot.slane %v1026, 2
  %v1154 = vrot.slane %v1027, 2
  %v1155 = vsel %vm477, %v1153, %v1154
  %v1156 = vrot.slane %v1028, 2
  %v1157 = vrot.slane %v1029, 2
  %v1158 = vsel %vm477, %v1156, %v1157
  %v1159 = vrot.slane %v1030, 2
  %v1160 = vrot.slane %v1031, 2
  %v1161 = vsel %vm477, %v1159, %v1160
  %v1162 = vrot.slane %v1032, 2
  %v1163 = vrot.slane %v1033, 2
  %v1164 = vsel %vm477, %v1162, %v1163
  %v1165 = vrot.slane %v1034, 2
  %v1166 = vrot.slane %v1035, 2
  %v1167 = vsel %vm477, %v1165, %v1166
  %v1168 = vrot.slane %v1036, 2
  %v1169 = vrot.slane %v1037, 2
  %v1170 = vsel %vm477, %v1168, %v1169
  %v1171 = vrot.slane %v1038, 2
  %v1172 = vrot.slane %v1039, 2
  %v1173 = vsel %vm477, %v1171, %v1172
  %v1174 = vrot.slane %v1040, 2
  %v1175 = vrot.slane %v1041, 2
  %v1176 = vsel %vm477, %v1174, %v1175
  %v1177 = vrot.slane %v1042, 2
  %v1178 = vrot.slane %v1043, 2
  %v1179 = vsel %vm477, %v1177, %v1178
  %v1180 = vrot.slane %v1044, 2
  %v1181 = vrot.slane %v1045, 2
  %v1182 = vsel %vm477, %v1180, %v1181
  %v1183 = vrot.slane %v1046, 2
  %v1184 = vrot.slane %v1047, 2
  %v1185 = vsel %vm477, %v1183, %v1184
  %v1186 = vrot.slane %v1048, 2
  %v1187 = vrot.slane %v1049, 2
  %v1188 = vsel %vm477, %v1186, %v1187
  %v1189 = vrot.slane %v1050, 2
  %v1190 = vrot.slane %v1051, 2
  %v1191 = vsel %vm477, %v1189, %v1190
  %vm1220 = vcmp.gt.f32.partialorder %v14, %v1152
  %vm1221 = vcmp.gt.f32.partialorder %v15, %v1151
  %vm1222 = vcmp.gt.f32.partialorder %v16, %v1155
  %vm1223 = vcmp.gt.f32.partialorder %v17, %v1154
  %vm1224 = vcmp.gt.f32.partialorder %v18, %v1158
  %vm1225 = vcmp.gt.f32.partialorder %v19, %v1157
  %vm1226 = vcmp.gt.f32.partialorder %v20, %v1161
  %vm1227 = vcmp.gt.f32.partialorder %v21, %v1160
  %vm1228 = vcmp.gt.f32.partialorder %v22, %v1164
  %vm1229 = vcmp.gt.f32.partialorder %v23, %v1163
  %vm1230 = vcmp.gt.f32.partialorder %v24, %v1167
  %vm1231 = vcmp.gt.f32.partialorder %v25, %v1166
  %vm1232 = vcmp.gt.f32.partialorder %v26, %v1170
  %vm1233 = vcmp.gt.f32.partialorder %v27, %v1169
  %vm1234 = vcmp.gt.f32.partialorder %v28, %v1173
  %vm1235 = vcmp.gt.f32.partialorder %v29, %v1172
  %vm1236 = vcmp.gt.f32.partialorder %v30, %v1176
  %vm1237 = vcmp.gt.f32.partialorder %v31, %v1175
  %vm1238 = vcmp.gt.f32.partialorder %v32, %v1179
  %vm1239 = vcmp.gt.f32.partialorder %v33, %v1178
  %vm1240 = vcmp.gt.f32.partialorder %v34, %v1182
  %vm1241 = vcmp.gt.f32.partialorder %v35, %v1181
  %vm1242 = vcmp.gt.f32.partialorder %v36, %v1185
  %vm1243 = vcmp.gt.f32.partialorder %v37, %v1184
  %vm1244 = vcmp.gt.f32.partialorder %v38, %v1188
  %vm1245 = vcmp.gt.f32.partialorder %v39, %v1187
  %vm1246 = vcmp.gt.f32.partialorder %v40, %v1191
  %vm1247 = vcmp.gt.f32.partialorder %v41, %v1190
  %v1248 = vsel %vm1220, %v14, %v1152
  %v1249 = vsel %vm1221, %v15, %v1151
  %v1250 = vsel %vm1222, %v16, %v1155
  %v1251 = vsel %vm1223, %v17, %v1154
  %v1252 = vsel %vm1224, %v18, %v1158
  %v1253 = vsel %vm1225, %v19, %v1157
  %v1254 = vsel %vm1226, %v20, %v1161
  %v1255 = vsel %vm1227, %v21, %v1160
  %v1256 = vsel %vm1228, %v22, %v1164
  %v1257 = vsel %vm1229, %v23, %v1163
  %v1258 = vsel %vm1230, %v24, %v1167
  %v1259 = vsel %vm1231, %v25, %v1166
  %v1260 = vsel %vm1232, %v26, %v1170
  %v1261 = vsel %vm1233, %v27, %v1169
  %v1262 = vsel %vm1234, %v28, %v1173
  %v1263 = vsel %vm1235, %v29, %v1172
  %v1264 = vsel %vm1236, %v30, %v1176
  %v1265 = vsel %vm1237, %v31, %v1175
  %v1266 = vsel %vm1238, %v32, %v1179
  %v1267 = vsel %vm1239, %v33, %v1178
  %v1268 = vsel %vm1240, %v34, %v1182
  %v1269 = vsel %vm1241, %v35, %v1181
  %v1270 = vsel %vm1242, %v36, %v1185
  %v1271 = vsel %vm1243, %v37, %v1184
  %v1272 = vsel %vm1244, %v38, %v1188
  %v1273 = vsel %vm1245, %v39, %v1187
  %v1274 = vsel %vm1246, %v40, %v1191
  %v1275 = vsel %vm1247, %v41, %v1190
  %v1276 = vrot.slane %v1094, 2
  %v1277 = vrot.slane %v1095, 2
  %v1278 = vsel %vm477, %v1276, %v1277
  %v1279 = vrot.slane %v1096, 2
  %v1280 = vrot.slane %v1097, 2
  %v1281 = vsel %vm477, %v1279, %v1280
  %v1282 = vrot.slane %v1098, 2
  %v1283 = vrot.slane %v1099, 2
  %v1284 = vsel %vm477, %v1282, %v1283
  %v1285 = vrot.slane %v1100, 2
  %v1286 = vrot.slane %v1101, 2
  %v1287 = vsel %vm477, %v1285, %v1286
  %v1288 = vrot.slane %v1102, 2
  %v1289 = vrot.slane %v1103, 2
  %v1290 = vsel %vm477, %v1288, %v1289
  %v1291 = vrot.slane %v1104, 2
  %v1292 = vrot.slane %v1105, 2
  %v1293 = vsel %vm477, %v1291, %v1292
  %v1294 = vrot.slane %v1106, 2
  %v1295 = vrot.slane %v1107, 2
  %v1296 = vsel %vm477, %v1294, %v1295
  %v1297 = vrot.slane %v1108, 2
  %v1298 = vrot.slane %v1109, 2
  %v1299 = vsel %vm477, %v1297, %v1298
  %v1300 = vrot.slane %v1110, 2
  %v1301 = vrot.slane %v1111, 2
  %v1302 = vsel %vm477, %v1300, %v1301
  %v1303 = vrot.slane %v1112, 2
  %v1304 = vrot.slane %v1113, 2
  %v1305 = vsel %vm477, %v1303, %v1304
  %v1306 = vrot.slane %v1114, 2
  %v1307 = vrot.slane %v1115, 2
  %v1308 = vsel %vm477, %v1306, %v1307
  %v1309 = vrot.slane %v1116, 2
  %v1310 = vrot.slane %v1117, 2
  %v1311 = vsel %vm477, %v1309, %v1310
  %v1312 = vrot.slane %v1118, 2
  %v1313 = vrot.slane %v1119, 2
  %v1314 = vsel %vm477, %v1312, %v1313
  %v1315 = vrot.slane %v1120, 2
  %v1316 = vrot.slane %v1121, 2
  %v1317 = vsel %vm477, %v1315, %v1316
  %v1318 = vsel %vm1220, 32, %v1278
  %v1319 = vsel %vm1221, 32, %v1277
  %v1320 = vsel %vm1222, 32, %v1281
  %v1321 = vsel %vm1223, 32, %v1280
  %v1322 = vsel %vm1224, 32, %v1284
  %v1323 = vsel %vm1225, 32, %v1283
  %v1324 = vsel %vm1226, 32, %v1287
  %v1325 = vsel %vm1227, 32, %v1286
  %v1326 = vsel %vm1228, 32, %v1290
  %v1327 = vsel %vm1229, 32, %v1289
  %v1328 = vsel %vm1230, 32, %v1293
  %v1329 = vsel %vm1231, 32, %v1292
  %v1330 = vsel %vm1232, 32, %v1296
  %v1331 = vsel %vm1233, 32, %v1295
  %v1332 = vsel %vm1234, 32, %v1299
  %v1333 = vsel %vm1235, 32, %v1298
  %v1334 = vsel %vm1236, 32, %v1302
  %v1335 = vsel %vm1237, 32, %v1301
  %v1336 = vsel %vm1238, 32, %v1305
  %v1337 = vsel %vm1239, 32, %v1304
  %v1338 = vsel %vm1240, 32, %v1308
  %v1339 = vsel %vm1241, 32, %v1307
  %v1340 = vsel %vm1242, 32, %v1311
  %v1341 = vsel %vm1243, 32, %v1310
  %v1342 = vsel %vm1244, 32, %v1314
  %v1343 = vsel %vm1245, 32, %v1313
  %v1344 = vsel %vm1246, 32, %v1317
  %v1345 = vsel %vm1247, 32, %v1316
  %v1374 = vrot.slane %v1248, 7
  %v1375 = vrot.slane %v1249, 7
  %v1376 = vsel %vm70, %v1374, %v1375
  %v1377 = vrot.slane %v1250, 7
  %v1378 = vrot.slane %v1251, 7
  %v1379 = vsel %vm70, %v1377, %v1378
  %v1380 = vrot.slane %v1252, 7
  %v1381 = vrot.slane %v1253, 7
  %v1382 = vsel %vm70, %v1380, %v1381
  %v1383 = vrot.slane %v1254, 7
  %v1384 = vrot.slane %v1255, 7
  %v1385 = vsel %vm70, %v1383, %v1384
  %v1386 = vrot.slane %v1256, 7
  %v1387 = vrot.slane %v1257, 7
  %v1388 = vsel %vm70, %v1386, %v1387
  %v1389 = vrot.slane %v1258, 7
  %v1390 = vrot.slane %v1259, 7
  %v1391 = vsel %vm70, %v1389, %v1390
  %v1392 = vrot.slane %v1260, 7
  %v1393 = vrot.slane %v1261, 7
  %v1394 = vsel %vm70, %v1392, %v1393
  %v1395 = vrot.slane %v1262, 7
  %v1396 = vrot.slane %v1263, 7
  %v1397 = vsel %vm70, %v1395, %v1396
  %v1398 = vrot.slane %v1264, 7
  %v1399 = vrot.slane %v1265, 7
  %v1400 = vsel %vm70, %v1398, %v1399
  %v1401 = vrot.slane %v1266, 7
  %v1402 = vrot.slane %v1267, 7
  %v1403 = vsel %vm70, %v1401, %v1402
  %v1404 = vrot.slane %v1268, 7
  %v1405 = vrot.slane %v1269, 7
  %v1406 = vsel %vm70, %v1404, %v1405
  %v1407 = vrot.slane %v1270, 7
  %v1408 = vrot.slane %v1271, 7
  %v1409 = vsel %vm70, %v1407, %v1408
  %v1410 = vrot.slane %v1272, 7
  %v1411 = vrot.slane %v1273, 7
  %v1412 = vsel %vm70, %v1410, %v1411
  %v1413 = vrot.slane %v1274, 7
  %v1414 = vrot.slane %v1275, 7
  %v1415 = vsel %vm70, %v1413, %v1414
  %vm1444 = vcmp.gt.f32.partialorder %v14, %v1374
  %vm1445 = vcmp.gt.f32.partialorder %v15, %v1376
  %vm1446 = vcmp.gt.f32.partialorder %v16, %v1377
  %vm1447 = vcmp.gt.f32.partialorder %v17, %v1379
  %vm1448 = vcmp.gt.f32.partialorder %v18, %v1380
  %vm1449 = vcmp.gt.f32.partialorder %v19, %v1382
  %vm1450 = vcmp.gt.f32.partialorder %v20, %v1383
  %vm1451 = vcmp.gt.f32.partialorder %v21, %v1385
  %vm1452 = vcmp.gt.f32.partialorder %v22, %v1386
  %vm1453 = vcmp.gt.f32.partialorder %v23, %v1388
  %vm1454 = vcmp.gt.f32.partialorder %v24, %v1389
  %vm1455 = vcmp.gt.f32.partialorder %v25, %v1391
  %vm1456 = vcmp.gt.f32.partialorder %v26, %v1392
  %vm1457 = vcmp.gt.f32.partialorder %v27, %v1394
  %vm1458 = vcmp.gt.f32.partialorder %v28, %v1395
  %vm1459 = vcmp.gt.f32.partialorder %v29, %v1397
  %vm1460 = vcmp.gt.f32.partialorder %v30, %v1398
  %vm1461 = vcmp.gt.f32.partialorder %v31, %v1400
  %vm1462 = vcmp.gt.f32.partialorder %v32, %v1401
  %vm1463 = vcmp.gt.f32.partialorder %v33, %v1403
  %vm1464 = vcmp.gt.f32.partialorder %v34, %v1404
  %vm1465 = vcmp.gt.f32.partialorder %v35, %v1406
  %vm1466 = vcmp.gt.f32.partialorder %v36, %v1407
  %vm1467 = vcmp.gt.f32.partialorder %v37, %v1409
  %vm1468 = vcmp.gt.f32.partialorder %v38, %v1410
  %vm1469 = vcmp.gt.f32.partialorder %v39, %v1412
  %vm1470 = vcmp.gt.f32.partialorder %v40, %v1413
  %vm1471 = vcmp.gt.f32.partialorder %v41, %v1415
  %v1472 = vsel %vm1444, %v14, %v1374
  %v1473 = vsel %vm1445, %v15, %v1376
  %v1474 = vsel %vm1446, %v16, %v1377
  %v1475 = vsel %vm1447, %v17, %v1379
  %v1476 = vsel %vm1448, %v18, %v1380
  %v1477 = vsel %vm1449, %v19, %v1382
  %v1478 = vsel %vm1450, %v20, %v1383
  %v1479 = vsel %vm1451, %v21, %v1385
  %v1480 = vsel %vm1452, %v22, %v1386
  %v1481 = vsel %vm1453, %v23, %v1388
  %v1482 = vsel %vm1454, %v24, %v1389
  %v1483 = vsel %vm1455, %v25, %v1391
  %v1484 = vsel %vm1456, %v26, %v1392
  %v1485 = vsel %vm1457, %v27, %v1394
  %v1486 = vsel %vm1458, %v28, %v1395
  %v1487 = vsel %vm1459, %v29, %v1397
  %v1488 = vsel %vm1460, %v30, %v1398
  %v1489 = vsel %vm1461, %v31, %v1400
  %v1490 = vsel %vm1462, %v32, %v1401
  %v1491 = vsel %vm1463, %v33, %v1403
  %v1492 = vsel %vm1464, %v34, %v1404
  %v1493 = vsel %vm1465, %v35, %v1406
  %v1494 = vsel %vm1466, %v36, %v1407
  %v1495 = vsel %vm1467, %v37, %v1409
  %v1496 = vsel %vm1468, %v38, %v1410
  %v1497 = vsel %vm1469, %v39, %v1412
  %v1498 = vsel %vm1470, %v40, %v1413
  %v1499 = vsel %vm1471, %v41, %v1415
  %v1500 = vrot.slane %v1318, 7
  %v1501 = vrot.slane %v1319, 7
  %v1502 = vsel %vm70, %v1500, %v1501
  %v1503 = vrot.slane %v1320, 7
  %v1504 = vrot.slane %v1321, 7
  %v1505 = vsel %vm70, %v1503, %v1504
  %v1506 = vrot.slane %v1322, 7
  %v1507 = vrot.slane %v1323, 7
  %v1508 = vsel %vm70, %v1506, %v1507
  %v1509 = vrot.slane %v1324, 7
  %v1510 = vrot.slane %v1325, 7
  %v1511 = vsel %vm70, %v1509, %v1510
  %v1512 = vrot.slane %v1326, 7
  %v1513 = vrot.slane %v1327, 7
  %v1514 = vsel %vm70, %v1512, %v1513
  %v1515 = vrot.slane %v1328, 7
  %v1516 = vrot.slane %v1329, 7
  %v1517 = vsel %vm70, %v1515, %v1516
  %v1518 = vrot.slane %v1330, 7
  %v1519 = vrot.slane %v1331, 7
  %v1520 = vsel %vm70, %v1518, %v1519
  %v1521 = vrot.slane %v1332, 7
  %v1522 = vrot.slane %v1333, 7
  %v1523 = vsel %vm70, %v1521, %v1522
  %v1524 = vrot.slane %v1334, 7
  %v1525 = vrot.slane %v1335, 7
  %v1526 = vsel %vm70, %v1524, %v1525
  %v1527 = vrot.slane %v1336, 7
  %v1528 = vrot.slane %v1337, 7
  %v1529 = vsel %vm70, %v1527, %v1528
  %v1530 = vrot.slane %v1338, 7
  %v1531 = vrot.slane %v1339, 7
  %v1532 = vsel %vm70, %v1530, %v1531
  %v1533 = vrot.slane %v1340, 7
  %v1534 = vrot.slane %v1341, 7
  %v1535 = vsel %vm70, %v1533, %v1534
  %v1536 = vrot.slane %v1342, 7
  %v1537 = vrot.slane %v1343, 7
  %v1538 = vsel %vm70, %v1536, %v1537
  %v1539 = vrot.slane %v1344, 7
  %v1540 = vrot.slane %v1345, 7
  %v1541 = vsel %vm70, %v1539, %v1540
  %v1542 = vsel %vm1444, 33, %v1500
  %v1543 = vsel %vm1445, 33, %v1502
  %v1544 = vsel %vm1446, 33, %v1503
  %v1545 = vsel %vm1447, 33, %v1505
  %v1546 = vsel %vm1448, 33, %v1506
  %v1547 = vsel %vm1449, 33, %v1508
  %v1548 = vsel %vm1450, 33, %v1509
  %v1549 = vsel %vm1451, 33, %v1511
  %v1550 = vsel %vm1452, 33, %v1512
  %v1551 = vsel %vm1453, 33, %v1514
  %v1552 = vsel %vm1454, 33, %v1515
  %v1553 = vsel %vm1455, 33, %v1517
  %v1554 = vsel %vm1456, 33, %v1518
  %v1555 = vsel %vm1457, 33, %v1520
  %v1556 = vsel %vm1458, 33, %v1521
  %v1557 = vsel %vm1459, 33, %v1523
  %v1558 = vsel %vm1460, 33, %v1524
  %v1559 = vsel %vm1461, 33, %v1526
  %v1560 = vsel %vm1462, 33, %v1527
  %v1561 = vsel %vm1463, 33, %v1529
  %v1562 = vsel %vm1464, 33, %v1530
  %v1563 = vsel %vm1465, 33, %v1532
  %v1564 = vsel %vm1466, 33, %v1533
  %v1565 = vsel %vm1467, 33, %v1535
  %v1566 = vsel %vm1468, 33, %v1536
  %v1567 = vsel %vm1469, 33, %v1538
  %v1568 = vsel %vm1470, 33, %v1539
  %v1569 = vsel %vm1471, 33, %v1541
  %v1598 = vrot.slane %v1472, 7
  %v1599 = vrot.slane %v1473, 7
  %v1600 = vsel %vm70, %v1598, %v1599
  %v1601 = vrot.slane %v1474, 7
  %v1602 = vrot.slane %v1475, 7
  %v1603 = vsel %vm70, %v1601, %v1602
  %v1604 = vrot.slane %v1476, 7
  %v1605 = vrot.slane %v1477, 7
  %v1606 = vsel %vm70, %v1604, %v1605
  %v1607 = vrot.slane %v1478, 7
  %v1608 = vrot.slane %v1479, 7
  %v1609 = vsel %vm70, %v1607, %v1608
  %v1610 = vrot.slane %v1480, 7
  %v1611 = vrot.slane %v1481, 7
  %v1612 = vsel %vm70, %v1610, %v1611
  %v1613 = vrot.slane %v1482, 7
  %v1614 = vrot.slane %v1483, 7
  %v1615 = vsel %vm70, %v1613, %v1614
  %v1616 = vrot.slane %v1484, 7
  %v1617 = vrot.slane %v1485, 7
  %v1618 = vsel %vm70, %v1616, %v1617
  %v1619 = vrot.slane %v1486, 7
  %v1620 = vrot.slane %v1487, 7
  %v1621 = vsel %vm70, %v1619, %v1620
  %v1622 = vrot.slane %v1488, 7
  %v1623 = vrot.slane %v1489, 7
  %v1624 = vsel %vm70, %v1622, %v1623
  %v1625 = vrot.slane %v1490, 7
  %v1626 = vrot.slane %v1491, 7
  %v1627 = vsel %vm70, %v1625, %v1626
  %v1628 = vrot.slane %v1492, 7
  %v1629 = vrot.slane %v1493, 7
  %v1630 = vsel %vm70, %v1628, %v1629
  %v1631 = vrot.slane %v1494, 7
  %v1632 = vrot.slane %v1495, 7
  %v1633 = vsel %vm70, %v1631, %v1632
  %v1634 = vrot.slane %v1496, 7
  %v1635 = vrot.slane %v1497, 7
  %v1636 = vsel %vm70, %v1634, %v1635
  %v1637 = vrot.slane %v1498, 7
  %v1638 = vrot.slane %v1499, 7
  %v1639 = vsel %vm70, %v1637, %v1638
  %vm1668 = vcmp.gt.f32.partialorder %v14, %v1598
  %vm1669 = vcmp.gt.f32.partialorder %v15, %v1600
  %vm1670 = vcmp.gt.f32.partialorder %v16, %v1601
  %vm1671 = vcmp.gt.f32.partialorder %v17, %v1603
  %vm1672 = vcmp.gt.f32.partialorder %v18, %v1604
  %vm1673 = vcmp.gt.f32.partialorder %v19, %v1606
  %vm1674 = vcmp.gt.f32.partialorder %v20, %v1607
  %vm1675 = vcmp.gt.f32.partialorder %v21, %v1609
  %vm1676 = vcmp.gt.f32.partialorder %v22, %v1610
  %vm1677 = vcmp.gt.f32.partialorder %v23, %v1612
  %vm1678 = vcmp.gt.f32.partialorder %v24, %v1613
  %vm1679 = vcmp.gt.f32.partialorder %v25, %v1615
  %vm1680 = vcmp.gt.f32.partialorder %v26, %v1616
  %vm1681 = vcmp.gt.f32.partialorder %v27, %v1618
  %vm1682 = vcmp.gt.f32.partialorder %v28, %v1619
  %vm1683 = vcmp.gt.f32.partialorder %v29, %v1621
  %vm1684 = vcmp.gt.f32.partialorder %v30, %v1622
  %vm1685 = vcmp.gt.f32.partialorder %v31, %v1624
  %vm1686 = vcmp.gt.f32.partialorder %v32, %v1625
  %vm1687 = vcmp.gt.f32.partialorder %v33, %v1627
  %vm1688 = vcmp.gt.f32.partialorder %v34, %v1628
  %vm1689 = vcmp.gt.f32.partialorder %v35, %v1630
  %vm1690 = vcmp.gt.f32.partialorder %v36, %v1631
  %vm1691 = vcmp.gt.f32.partialorder %v37, %v1633
  %vm1692 = vcmp.gt.f32.partialorder %v38, %v1634
  %vm1693 = vcmp.gt.f32.partialorder %v39, %v1636
  %vm1694 = vcmp.gt.f32.partialorder %v40, %v1637
  %vm1695 = vcmp.gt.f32.partialorder %v41, %v1639
  %v1696 = vsel %vm1668, %v14, %v1598
  %v1697 = vsel %vm1669, %v15, %v1600
  %v1698 = vsel %vm1670, %v16, %v1601
  %v1699 = vsel %vm1671, %v17, %v1603
  %v1700 = vsel %vm1672, %v18, %v1604
  %v1701 = vsel %vm1673, %v19, %v1606
  %v1702 = vsel %vm1674, %v20, %v1607
  %v1703 = vsel %vm1675, %v21, %v1609
  %v1704 = vsel %vm1676, %v22, %v1610
  %v1705 = vsel %vm1677, %v23, %v1612
  %v1706 = vsel %vm1678, %v24, %v1613
  %v1707 = vsel %vm1679, %v25, %v1615
  %v1708 = vsel %vm1680, %v26, %v1616
  %v1709 = vsel %vm1681, %v27, %v1618
  %v1710 = vsel %vm1682, %v28, %v1619
  %v1711 = vsel %vm1683, %v29, %v1621
  %v1712 = vsel %vm1684, %v30, %v1622
  %v1713 = vsel %vm1685, %v31, %v1624
  %v1714 = vsel %vm1686, %v32, %v1625
  %v1715 = vsel %vm1687, %v33, %v1627
  %v1716 = vsel %vm1688, %v34, %v1628
  %v1717 = vsel %vm1689, %v35, %v1630
  %v1718 = vsel %vm1690, %v36, %v1631
  %v1719 = vsel %vm1691, %v37, %v1633
  %v1720 = vsel %vm1692, %v38, %v1634
  %v1721 = vsel %vm1693, %v39, %v1636
  %v1722 = vsel %vm1694, %v40, %v1637
  %v1723 = vsel %vm1695, %v41, %v1639
  %v1724 = vrot.slane %v1542, 7
  %v1725 = vrot.slane %v1543, 7
  %v1726 = vsel %vm70, %v1724, %v1725
  %v1727 = vrot.slane %v1544, 7
  %v1728 = vrot.slane %v1545, 7
  %v1729 = vsel %vm70, %v1727, %v1728
  %v1730 = vrot.slane %v1546, 7
  %v1731 = vrot.slane %v1547, 7
  %v1732 = vsel %vm70, %v1730, %v1731
  %v1733 = vrot.slane %v1548, 7
  %v1734 = vrot.slane %v1549, 7
  %v1735 = vsel %vm70, %v1733, %v1734
  %v1736 = vrot.slane %v1550, 7
  %v1737 = vrot.slane %v1551, 7
  %v1738 = vsel %vm70, %v1736, %v1737
  %v1739 = vrot.slane %v1552, 7
  %v1740 = vrot.slane %v1553, 7
  %v1741 = vsel %vm70, %v1739, %v1740
  %v1742 = vrot.slane %v1554, 7
  %v1743 = vrot.slane %v1555, 7
  %v1744 = vsel %vm70, %v1742, %v1743
  %v1745 = vrot.slane %v1556, 7
  %v1746 = vrot.slane %v1557, 7
  %v1747 = vsel %vm70, %v1745, %v1746
  %v1748 = vrot.slane %v1558, 7
  %v1749 = vrot.slane %v1559, 7
  %v1750 = vsel %vm70, %v1748, %v1749
  %v1751 = vrot.slane %v1560, 7
  %v1752 = vrot.slane %v1561, 7
  %v1753 = vsel %vm70, %v1751, %v1752
  %v1754 = vrot.slane %v1562, 7
  %v1755 = vrot.slane %v1563, 7
  %v1756 = vsel %vm70, %v1754, %v1755
  %v1757 = vrot.slane %v1564, 7
  %v1758 = vrot.slane %v1565, 7
  %v1759 = vsel %vm70, %v1757, %v1758
  %v1760 = vrot.slane %v1566, 7
  %v1761 = vrot.slane %v1567, 7
  %v1762 = vsel %vm70, %v1760, %v1761
  %v1763 = vrot.slane %v1568, 7
  %v1764 = vrot.slane %v1569, 7
  %v1765 = vsel %vm70, %v1763, %v1764
  %v1766 = vsel %vm1668, 34, %v1724
  %v1767 = vsel %vm1669, 34, %v1726
  %v1768 = vsel %vm1670, 34, %v1727
  %v1769 = vsel %vm1671, 34, %v1729
  %v1770 = vsel %vm1672, 34, %v1730
  %v1771 = vsel %vm1673, 34, %v1732
  %v1772 = vsel %vm1674, 34, %v1733
  %v1773 = vsel %vm1675, 34, %v1735
  %v1774 = vsel %vm1676, 34, %v1736
  %v1775 = vsel %vm1677, 34, %v1738
  %v1776 = vsel %vm1678, 34, %v1739
  %v1777 = vsel %vm1679, 34, %v1741
  %v1778 = vsel %vm1680, 34, %v1742
  %v1779 = vsel %vm1681, 34, %v1744
  %v1780 = vsel %vm1682, 34, %v1745
  %v1781 = vsel %vm1683, 34, %v1747
  %v1782 = vsel %vm1684, 34, %v1748
  %v1783 = vsel %vm1685, 34, %v1750
  %v1784 = vsel %vm1686, 34, %v1751
  %v1785 = vsel %vm1687, 34, %v1753
  %v1786 = vsel %vm1688, 34, %v1754
  %v1787 = vsel %vm1689, 34, %v1756
  %v1788 = vsel %vm1690, 34, %v1757
  %v1789 = vsel %vm1691, 34, %v1759
  %v1790 = vsel %vm1692, 34, %v1760
  %v1791 = vsel %vm1693, 34, %v1762
  %v1792 = vsel %vm1694, 34, %v1763
  %v1793 = vsel %vm1695, 34, %v1765
  %v1794 = vlaneseq
  %v1795 = vshrl.u32 %v1794, 7
  %v1796 = vadd.s32 %v1795, 8
  %1797 = vst [vmem:[%s1 - $0x2] sm:$0xfc] %v1696
  %1798 = vst [vmem:[%s1 + $0x6] sm:$0xff] %v1697
  %1799 = vst [vmem:[%s1 + $0xe] sm:$0xfc] %v1698
  %1800 = vst [vmem:[%s1 + $0x16] sm:$0xff] %v1699
  %1801 = vst [vmem:[%s1 + $0x1e] sm:$0xfc] %v1700
  %1802 = vst [vmem:[%s1 + $0x26] sm:$0xff] %v1701
  %1803 = vst [vmem:[%s1 + $0x2e] sm:$0xfc] %v1702
  %1804 = vst [vmem:[%s1 + $0x36] sm:$0xff] %v1703
  %1805 = vst [vmem:[%s1 + $0x3e] sm:$0xfc] %v1704
  %1806 = vst [vmem:[%s1 + $0x46] sm:$0xff] %v1705
  %1807 = vst [vmem:[%s1 + $0x4e] sm:$0xfc] %v1706
  %1808 = vst [vmem:[%s1 + $0x56] sm:$0xff] %v1707
  %1809 = vst [vmem:[%s1 + $0x5e] sm:$0xfc] %v1708
  %1810 = vst [vmem:[%s1 + $0x66] sm:$0xff] %v1709
  %1811 = vst [vmem:[%s1 + $0x6e] sm:$0xfc] %v1710
  %1812 = vst [vmem:[%s1 + $0x76] sm:$0xff] %v1711
  %1813 = vst [vmem:[%s1 + $0x7e] sm:$0xfc] %v1712
  %1814 = vst [vmem:[%s1 + $0x86] sm:$0xff] %v1713
  %1815 = vst [vmem:[%s1 + $0x8e] sm:$0xfc] %v1714
  %1816 = vst [vmem:[%s1 + $0x96] sm:$0xff] %v1715
  %1817 = vst [vmem:[%s1 + $0x9e] sm:$0xfc] %v1716
  %1818 = vst [vmem:[%s1 + $0xa6] sm:$0xff] %v1717
  %1819 = vst [vmem:[%s1 + $0xae] sm:$0xfc] %v1718
  %1820 = vst [vmem:[%s1 + $0xb6] sm:$0xff] %v1719
  %1821 = vst [vmem:[%s1 + $0xbe] sm:$0xfc] %v1720
  %1822 = vst [vmem:[%s1 + $0xc6] sm:$0xff] %v1721
  %1823 = vst [vmem:[%s1 + $0xce] sm:$0xfc] %v1722
  %1824 = vst [vmem:[%s1 + $0xd6] sm:$0xff] %v1723
  %v1825 = vadd.s32 %v1795, 16
  %v1826 = vadd.s32 %v1796, 16
  %v1827 = vadd.s32 %v1795, 32
  %v1828 = vadd.s32 %v1796, 32
  %v1829 = vadd.s32 %v1795, 48
  %v1830 = vadd.s32 %v1796, 48
  %v1831 = vadd.s32 %v1795, 64
  %v1832 = vadd.s32 %v1796, 64
  %v1833 = vadd.s32 %v1795, 80
  %v1834 = vadd.s32 %v1796, 80
  %v1835 = vadd.s32 %v1795, 96
  %v1836 = vadd.s32 %v1796, 96
  %v1837 = vadd.s32 %v1795, 112
  %v1838 = vadd.s32 %v1796, 112
  %v1839 = vadd.s32 %v1795, 128
  %v1840 = vadd.s32 %v1796, 128
  %v1841 = vadd.s32 %v1795, 144
  %v1842 = vadd.s32 %v1796, 144
  %v1843 = vadd.s32 %v1795, 160
  %v1844 = vadd.s32 %v1796, 160
  %v1845 = vadd.s32 %v1795, 176
  %v1846 = vadd.s32 %v1796, 176
  %v1847 = vadd.s32 %v1795, 192
  %v1848 = vadd.s32 %v1796, 192
  %v1849 = vadd.s32 %v1795, 208
  %v1850 = vadd.s32 %v1796, 208
  %v1851 = vrot.slane %v1766, 2
  %v1852 = vrot.slane %v1767, 2
  %v1853 = vsel %vm477, %v1851, %v1852
  %v1854 = vrot.slane %v1768, 2
  %v1855 = vrot.slane %v1769, 2
  %v1856 = vsel %vm477, %v1854, %v1855
  %v1857 = vrot.slane %v1770, 2
  %v1858 = vrot.slane %v1771, 2
  %v1859 = vsel %vm477, %v1857, %v1858
  %v1860 = vrot.slane %v1772, 2
  %v1861 = vrot.slane %v1773, 2
  %v1862 = vsel %vm477, %v1860, %v1861
  %v1863 = vrot.slane %v1774, 2
  %v1864 = vrot.slane %v1775, 2
  %v1865 = vsel %vm477, %v1863, %v1864
  %v1866 = vrot.slane %v1776, 2
  %v1867 = vrot.slane %v1777, 2
  %v1868 = vsel %vm477, %v1866, %v1867
  %v1869 = vrot.slane %v1778, 2
  %v1870 = vrot.slane %v1779, 2
  %v1871 = vsel %vm477, %v1869, %v1870
  %v1872 = vrot.slane %v1780, 2
  %v1873 = vrot.slane %v1781, 2
  %v1874 = vsel %vm477, %v1872, %v1873
  %v1875 = vrot.slane %v1782, 2
  %v1876 = vrot.slane %v1783, 2
  %v1877 = vsel %vm477, %v1875, %v1876
  %v1878 = vrot.slane %v1784, 2
  %v1879 = vrot.slane %v1785, 2
  %v1880 = vsel %vm477, %v1878, %v1879
  %v1881 = vrot.slane %v1786, 2
  %v1882 = vrot.slane %v1787, 2
  %v1883 = vsel %vm477, %v1881, %v1882
  %v1884 = vrot.slane %v1788, 2
  %v1885 = vrot.slane %v1789, 2
  %v1886 = vsel %vm477, %v1884, %v1885
  %v1887 = vrot.slane %v1790, 2
  %v1888 = vrot.slane %v1791, 2
  %v1889 = vsel %vm477, %v1887, %v1888
  %v1890 = vrot.slane %v1792, 2
  %v1891 = vrot.slane %v1793, 2
  %v1892 = vsel %vm477, %v1890, %v1891
  %v1893 = vadd.s32 %v1795, %v1853
  %v1894 = vadd.s32 %v1796, %v1852
  %v1895 = vadd.s32 %v1825, %v1856
  %v1896 = vadd.s32 %v1826, %v1855
  %v1897 = vadd.s32 %v1827, %v1859
  %v1898 = vadd.s32 %v1828, %v1858
  %v1899 = vadd.s32 %v1829, %v1862
  %v1900 = vadd.s32 %v1830, %v1861
  %v1901 = vadd.s32 %v1831, %v1865
  %v1902 = vadd.s32 %v1832, %v1864
  %v1903 = vadd.s32 %v1833, %v1868
  %v1904 = vadd.s32 %v1834, %v1867
  %v1905 = vadd.s32 %v1835, %v1871
  %v1906 = vadd.s32 %v1836, %v1870
  %v1907 = vadd.s32 %v1837, %v1874
  %v1908 = vadd.s32 %v1838, %v1873
  %v1909 = vadd.s32 %v1839, %v1877
  %v1910 = vadd.s32 %v1840, %v1876
  %v1911 = vadd.s32 %v1841, %v1880
  %v1912 = vadd.s32 %v1842, %v1879
  %v1913 = vadd.s32 %v1843, %v1883
  %v1914 = vadd.s32 %v1844, %v1882
  %v1915 = vadd.s32 %v1845, %v1886
  %v1916 = vadd.s32 %v1846, %v1885
  %v1917 = vadd.s32 %v1847, %v1889
  %v1918 = vadd.s32 %v1848, %v1888
  %v1919 = vadd.s32 %v1849, %v1892
  %v1920 = vadd.s32 %v1850, %v1891
  %1921 = vst [vmem:[%s2] sm:$0xff] %v1893
  %1922 = vst [vmem:[%s2 + $0x8] sm:$0x3f] %v1894
  %1923 = vst [vmem:[%s2 + $0x10] sm:$0xff] %v1895
  %1924 = vst [vmem:[%s2 + $0x18] sm:$0x3f] %v1896
  %1925 = vst [vmem:[%s2 + $0x20] sm:$0xff] %v1897
  %1926 = vst [vmem:[%s2 + $0x28] sm:$0x3f] %v1898
  %1927 = vst [vmem:[%s2 + $0x30] sm:$0xff] %v1899
  %1928 = vst [vmem:[%s2 + $0x38] sm:$0x3f] %v1900
  %1929 = vst [vmem:[%s2 + $0x40] sm:$0xff] %v1901
  %1930 = vst [vmem:[%s2 + $0x48] sm:$0x3f] %v1902
  %1931 = vst [vmem:[%s2 + $0x50] sm:$0xff] %v1903
  %1932 = vst [vmem:[%s2 + $0x58] sm:$0x3f] %v1904
  %1933 = vst [vmem:[%s2 + $0x60] sm:$0xff] %v1905
  %1934 = vst [vmem:[%s2 + $0x68] sm:$0x3f] %v1906
  %1935 = vst [vmem:[%s2 + $0x70] sm:$0xff] %v1907
  %1936 = vst [vmem:[%s2 + $0x78] sm:$0x3f] %v1908
  %1937 = vst [vmem:[%s2 + $0x80] sm:$0xff] %v1909
  %1938 = vst [vmem:[%s2 + $0x88] sm:$0x3f] %v1910
  %1939 = vst [vmem:[%s2 + $0x90] sm:$0xff] %v1911
  %1940 = vst [vmem:[%s2 + $0x98] sm:$0x3f] %v1912
  %1941 = vst [vmem:[%s2 + $0xa0] sm:$0xff] %v1913
  %1942 = vst [vmem:[%s2 + $0xa8] sm:$0x3f] %v1914
  %1943 = vst [vmem:[%s2 + $0xb0] sm:$0xff] %v1915
  %1944 = vst [vmem:[%s2 + $0xb8] sm:$0x3f] %v1916
  %1945 = vst [vmem:[%s2 + $0xc0] sm:$0xff] %v1917
  %1946 = vst [vmem:[%s2 + $0xc8] sm:$0x3f] %v1918
  %1947 = vst [vmem:[%s2 + $0xd0] sm:$0xff] %v1919
  %1948 = vst [vmem:[%s2 + $0xd8] sm:$0x3f] %v1920
  // Predicated region
  $region6: #{maxpool2d_3x3_s1.1} parent=0 // pred_check
    _
  $region7: #{maxpool2d_3x3_s1.1} parent=0 // pred_check_branch
    %1950 = sbr.rel (0) target = $region9
  $region8: #{maxpool2d_3x3_s1.1} parent=0 // pred_region
    _
  $region9: #{maxpool2d_3x3_s1.1} parent=0 // pred_fallthru
    _
  // Predicated region
  $region10: #{maxpool2d_3x3_s1.1} parent=0 // pred_check
    _
  $region11: #{maxpool2d_3x3_s1.1} parent=0 // pred_check_branch
    %1952 = sbr.rel (0) target = $region13
  $region12: #{maxpool2d_3x3_s1.1} parent=0 // pred_region
    _
  $region13: #{maxpool2d_3x3_s1.1} parent=0 // pred_fallthru
    _
  // Predicated region
  $region14: #{maxpool2d_3x3_s1.1} parent=0 // pred_check
    _
  $region15: #{maxpool2d_3x3_s1.1} parent=0 // pred_check_branch
    %1954 = sbr.rel (0) target = $region17
  $region16: #{maxpool2d_3x3_s1.1} parent=0 // pred_region
    _
  $region17: #{maxpool2d_3x3_s1.1} parent=0 // pred_fallthru
    _
  // Predicated region
  $region18: #{maxpool2d_3x3_s1.1} parent=0 // pred_check
    _
  $region19: #{maxpool2d_3x3_s1.1} parent=0 // pred_check_branch
    %1956 = sbr.rel (0) target = $region21
  $region20: #{maxpool2d_3x3_s1.1} parent=0 // pred_region
    _
  $region21: #{maxpool2d_3x3_s1.1} parent=0 // pred_fallthru
    _

</llo_original>
